<compile_context>
chip_gen: v5e
topology: v5e:2x2
jax: 0.10.0
libtpu: 0.0.40
codegen_flags: <defaults>
</compile_context>

<pallas_src>
import functools

import numpy as np
import jax
import jax.numpy as jnp
from jax import lax
from jax.experimental import pallas as pl
from jax.experimental.pallas import tpu as pltpu

_EPS = 1e-8


# ------------------------------ in-kernel math ------------------------------

def _pixel_norm_cf(h):
    """PixelwiseNormalization for a channels-first 2-D slab h: (C, N)."""
    return h * lax.rsqrt(jnp.mean(h * h, axis=0, keepdims=True) + _EPS)


def _mish(h):
    return h * jnp.tanh(jax.nn.softplus(h))


def _disc_block_kernel(p1_ref, w1m_ref, xf_ref, bilt_ref, t3t_ref, w2_ref, ws_ref, o_ref):
    """Whole DiscriminatorBlock forward in one invocation (no grid)."""
    f32 = jnp.float32
    n_taps = t3t_ref.shape[0]  # 9 (3x3 taps), static

    # conv1: 4x4 / stride 2 / pad 1  ==  (Cout, Cin*16) @ im2col(x): one MXU matmul.
    h = jnp.dot(w1m_ref[...], p1_ref[...], preferred_element_type=f32)   # (Cout, B*OH*OW)
    h = _mish(_pixel_norm_cf(h))

    # conv2: 3x3 / stride 1 / pad 1 as 9 taps: channel matmul + 0/1 spatial-shift matmul.
    h2 = jnp.zeros_like(h)
    for t in range(n_taps):
        h2 = h2 + jnp.dot(jnp.dot(w2_ref[t], h, preferred_element_type=f32),
                          t3t_ref[t], preferred_element_type=f32)

    # skip path: exact align_corners=True bilinear 0.5x downsample (one matmul),
    # then the 3x3 / stride 1 / pad 1 skip conv (same tap operators).
    xs = jnp.dot(xf_ref[...], bilt_ref[...], preferred_element_type=f32)  # (Cin, B*OH*OW)
    skip = jnp.zeros_like(h)
    for t in range(n_taps):
        skip = skip + jnp.dot(jnp.dot(ws_ref[t], xs, preferred_element_type=f32),
                              t3t_ref[t], preferred_element_type=f32)

    # residual add -> PixelNorm -> Mish; single lane-dense (Cout, 128) store.
    o_ref[...] = _mish(_pixel_norm_cf(h2 + skip))


# ----------------------- host-side constant spatial operators -----------------------

def _bilinear_rows(n_in, n_out):
    """(n_out, n_in) one-axis interpolation matrix of
    F.interpolate(..., mode='bilinear', align_corners=True)."""
    P = np.zeros((n_out, n_in), np.float32)
    if n_out == 1:
        P[0, 0] = 1.0
        return P
    ratio = (n_in - 1.0) / (n_out - 1.0)
    for o in range(n_out):
        src = o * ratio
        lo = int(np.floor(src))
        hi = min(lo + 1, n_in - 1)
        w = src - lo
        P[o, lo] += 1.0 - w
        P[o, hi] += w
    return P


def _shift_rows(n, off):
    """(n, n) 0/1 matrix: output row o selects input row o+off (zero if out of range)."""
    S = np.zeros((n, n), np.float32)
    for o in range(n):
        i = o + off
        if 0 <= i < n:
            S[o, i] = 1.0
    return S


# ------------------------------------ wrapper ------------------------------------

@jax.jit
def discriminator_block(x, w1, w2, wskip):
    """x: (B, Cin, H, W) f32.  Weights in PyTorch layout:
       w1: (Cout, Cin, 4, 4), w2: (Cout, Cout, 3, 3), wskip: (Cout, Cin, 3, 3)."""
    B, Cin, H, W = x.shape
    Cout = w1.shape[0]
    OH, OW = H // 2, W // 2
    f32 = jnp.float32

    # WeightScaledConv2d: weight * sqrt(2 / (input_nc * k**2)).
    s1 = np.float32(np.sqrt(2.0 / (Cin * 4 * 4)))
    s2 = np.float32(np.sqrt(2.0 / (Cout * 3 * 3)))
    ss = np.float32(np.sqrt(2.0 / (Cin * 3 * 3)))

    # --- layout plumbing in the wrapper (gather / reshape only) ---
    # im2col patches of x for the 4x4 stride-2 conv: (Cin*16, B*OH*OW),
    # row index = ci*16 + ky*4 + kx, column index = b*OH*OW + oy*OW + ox.
    xp = jnp.pad(x, ((0, 0), (0, 0), (1, 1), (1, 1)))
    taps = [xp[:, :, ky:ky + 2 * OH:2, kx:kx + 2 * OW:2]
            for ky in range(4) for kx in range(4)]                 # each (B, Cin, OH, OW)
    p1 = jnp.stack(taps, axis=0)                                   # (16, B, Cin, OH, OW)
    p1 = jnp.transpose(p1, (2, 0, 1, 3, 4)).reshape(Cin * 16, B * OH * OW)

    # conv1 weight as a single matmul operand (rows match the im2col ordering).
    w1m = (w1 * s1).reshape(Cout, Cin * 16)

    # Input for the skip path: channels-first with flat (batch, spatial) columns.
    xf = jnp.transpose(x, (1, 0, 2, 3)).reshape(Cin, B * H * W)

    # Per-tap channel matrices of the two 3x3 convs: index [ky*3+kx, co, ci].
    w2t = jnp.transpose(w2 * s2, (2, 3, 0, 1)).reshape(9, Cout, Cout)
    wst = jnp.transpose(wskip * ss, (2, 3, 0, 1)).reshape(9, Cout, Cin)

    # --- compile-time constant spatial operators (numpy -> XLA constants) ---
    # bilinear 0.5x (align_corners=True), applied as xf @ bilt: (B*H*W, B*OH*OW).
    bil = np.kron(_bilinear_rows(H, OH), _bilinear_rows(W, OW))     # (OH*OW, H*W)
    bilt = np.kron(np.eye(B, dtype=np.float32), bil).T              # (B*H*W, B*OH*OW)

    # 3x3 stride-1 pad-1 tap shifts on the OHxOW grid: (9, B*OH*OW, B*OH*OW), transposed.
    t3t = np.stack(
        [np.kron(np.eye(B, dtype=np.float32),
                 np.kron(_shift_rows(OH, ky - 1), _shift_rows(OW, kx - 1))).T
         for ky in range(3) for kx in range(3)], axis=0)

    out_flat = pl.pallas_call(
        _disc_block_kernel,
        out_shape=jax.ShapeDtypeStruct((Cout, B * OH * OW), f32),
        in_specs=[pl.BlockSpec(memory_space=pltpu.MemorySpace.VMEM)] * 7,
        out_specs=pl.BlockSpec(memory_space=pltpu.MemorySpace.VMEM),
    )(p1.astype(f32), w1m.astype(f32), xf.astype(f32),
      jnp.asarray(bilt, f32), jnp.asarray(t3t, f32),
      w2t.astype(f32), wst.astype(f32))

    # (Cout, B*OH*OW) -> (B, Cout, OH, OW)
    return jnp.transpose(out_flat.reshape(Cout, B, OH, OW), (1, 0, 2, 3))


# ----------------------------------- reference -----------------------------------

def _reference(x, w1, w2, wskip):
    """Pure-JAX (XLA) reference mirroring the PyTorch DiscriminatorBlock exactly."""
    B, Cin, H, W = x.shape
    Cout = w1.shape[0]
    OH, OW = H // 2, W // 2
    s1 = np.float32(np.sqrt(2.0 / (Cin * 4 * 4)))
    s2 = np.float32(np.sqrt(2.0 / (Cout * 3 * 3)))
    ss = np.float32(np.sqrt(2.0 / (Cin * 3 * 3)))

    def pnorm(h):  # mean over channel dim of NCHW
        return h * lax.rsqrt(jnp.mean(h * h, axis=1, keepdims=True) + _EPS)

    def mish(h):
        return h * jnp.tanh(jax.nn.softplus(h))

    conv = functools.partial(lax.conv_general_dilated,
                             dimension_numbers=("NCHW", "OIHW", "NCHW"),
                             precision=lax.Precision.HIGHEST)

    h = conv(x, w1 * s1, window_strides=(2, 2), padding=((1, 1), (1, 1)))
    h = mish(pnorm(h))
    h = conv(h, w2 * s2, window_strides=(1, 1), padding=((1, 1), (1, 1)))

    # F.interpolate(x, scale_factor=0.5, mode='bilinear', align_corners=True,
    #               recompute_scale_factor=True): out = floor(H/2), src = o*(in-1)/(out-1).
    def coords(n_in, n_out):
        src = np.arange(n_out) * ((n_in - 1.0) / (n_out - 1.0)) if n_out > 1 else np.zeros(1)
        lo = np.floor(src).astype(np.int32)
        hi = np.minimum(lo + 1, n_in - 1).astype(np.int32)
        return lo, hi, (src - lo).astype(np.float32)

    y0, y1, wy = coords(H, OH)
    x0, x1, wx = coords(W, OW)
    wy = wy[None, None, :, None]
    wx = wx[None, None, None, :]
    r0, r1 = x[:, :, y0, :], x[:, :, y1, :]
    top = (1.0 - wx) * r0[:, :, :, x0] + wx * r0[:, :, :, x1]
    bot = (1.0 - wx) * r1[:, :, :, x0] + wx * r1[:, :, :, x1]
    xb = (1.0 - wy) * top + wy * bot

    skip = conv(xb, wskip * ss, window_strides=(1, 1), padding=((1, 1), (1, 1)))
    return mish(pnorm(h + skip))


if __name__ == "__main__":
    B, Cin, Cout, H, W = 2, 4, 8, 16, 16

    key = jax.random.PRNGKey(0)
    k_x, k_1, k_2, k_s = jax.random.split(key, 4)
    x = jax.random.normal(k_x, (B, Cin, H, W), dtype=jnp.float32)
    w1 = jax.random.normal(k_1, (Cout, Cin, 4, 4), dtype=jnp.float32)
    w2 = jax.random.normal(k_2, (Cout, Cout, 3, 3), dtype=jnp.float32)
    wskip = jax.random.normal(k_s, (Cout, Cin, 3, 3), dtype=jnp.float32)

    out = jax.block_until_ready(discriminator_block(x, w1, w2, wskip))
    ref = jax.block_until_ready(_reference(x, w1, w2, wskip))

    assert out.shape == (B, Cout, H // 2, W // 2)
    # Tolerance covers possible bf16-pass MXU rounding differences between the
    # Pallas dots and the HIGHEST-precision XLA reference convolutions.
    np.testing.assert_allclose(np.asarray(out), np.asarray(ref), rtol=2e-2, atol=2e-2)

    print("KERNEL_OK")
</pallas_src>

<mosaic_0001>
module attributes {stable_mosaic.version = 11 : i64} {
  func.func @_disc_block_kernel(%arg0: memref<64x128xf32, #tpu.memory_space<vmem>>, %arg1: memref<8x64xf32, #tpu.memory_space<vmem>>, %arg2: memref<4x512xf32, #tpu.memory_space<vmem>>, %arg3: memref<512x128xf32, #tpu.memory_space<vmem>>, %arg4: memref<9x128x128xf32, #tpu.memory_space<vmem>>, %arg5: memref<9x8x8xf32, #tpu.memory_space<vmem>>, %arg6: memref<9x8x4xf32, #tpu.memory_space<vmem>>, %arg7: memref<8x128xf32, #tpu.memory_space<vmem>>) attributes {dimension_semantics = [], scalar_prefetch = 0 : i64, scratch_operands = 0 : i64, tpu.core_type = #tpu.core_type<tc>} {
    %c0 = arith.constant 0 : index
    %c0_0 = arith.constant 0 : index
    %0 = vector.load %arg1[%c0, %c0_0] : memref<8x64xf32, #tpu.memory_space<vmem>>, vector<8x64xf32>
    %c0_1 = arith.constant 0 : index
    %c0_2 = arith.constant 0 : index
    %1 = vector.load %arg0[%c0_1, %c0_2] : memref<64x128xf32, #tpu.memory_space<vmem>>, vector<64x128xf32>
    %cst = arith.constant dense<0.000000e+00> : vector<8x128xf32>
    %2 = tpu.matmul %0, %1, %cst {dimension_numbers = #tpu.dot_dimension_numbers<[1], [0], [0], [1], [0, 0, 1, 1], [], []>} : vector<8x64xf32>, vector<64x128xf32>, vector<8x128xf32> -> vector<8x128xf32>
    %3 = arith.mulf %2, %2 : vector<8x128xf32>
    %cst_3 = arith.constant dense<0.000000e+00> : vector<128xf32>
    %4 = vector.multi_reduction <add>, %3, %cst_3 [0] : vector<8x128xf32> to vector<128xf32>
    %5 = vector.shape_cast %4 : vector<128xf32> to vector<1x128xf32>
    %cst_4 = arith.constant 8.000000e+00 : f32
    %6 = vector.broadcast %cst_4 : f32 to vector<1x128xf32>
    %7 = arith.divf %5, %6 : vector<1x128xf32>
    %cst_5 = arith.constant 9.99999993E-9 : f32
    %8 = vector.broadcast %cst_5 : f32 to vector<1x128xf32>
    %9 = arith.addf %7, %8 : vector<1x128xf32>
    %10 = math.rsqrt %9 : vector<1x128xf32>
    %11 = vector.broadcast %10 : vector<1x128xf32> to vector<8x128xf32>
    %12 = arith.mulf %2, %11 : vector<8x128xf32>
    %cst_6 = arith.constant 0.000000e+00 : f32
    %13 = vector.broadcast %cst_6 : f32 to vector<8x128xf32>
    %14 = arith.maximumf %12, %13 : vector<8x128xf32>
    %15 = vector.broadcast %cst_6 : f32 to vector<8x128xf32>
    %16 = arith.subf %12, %15 : vector<8x128xf32>
    %17 = arith.cmpf one, %16, %16 : vector<8x128xf32>
    %18 = vector.broadcast %cst_6 : f32 to vector<8x128xf32>
    %19 = arith.addf %12, %18 : vector<8x128xf32>
    %20 = math.absf %16 : vector<8x128xf32>
    %cst_7 = arith.constant 0.000000e+00 : f32
    %21 = vector.broadcast %cst_7 : f32 to vector<8x128xf32>
    %22 = arith.subf %21, %20 : vector<8x128xf32>
    %23 = math.exp %22 : vector<8x128xf32>
    %24 = math.log1p %23 : vector<8x128xf32>
    %25 = arith.addf %14, %24 : vector<8x128xf32>
    %26 = arith.select %17, %19, %25 : vector<8x128xi1>, vector<8x128xf32>
    %27 = math.tanh %26 : vector<8x128xf32>
    %28 = arith.mulf %12, %27 : vector<8x128xf32>
    %cst_8 = arith.constant 0.000000e+00 : f32
    %29 = vector.broadcast %cst_8 : f32 to vector<8x128xf32>
    %c0_9 = arith.constant 0 : index
    %c0_10 = arith.constant 0 : index
    %c0_11 = arith.constant 0 : index
    %30 = vector.load %arg5[%c0_9, %c0_10, %c0_11] : memref<9x8x8xf32, #tpu.memory_space<vmem>>, vector<1x8x8xf32>
    %31 = vector.shape_cast %30 : vector<1x8x8xf32> to vector<8x8xf32>
    %cst_12 = arith.constant dense<0.000000e+00> : vector<8x128xf32>
    %32 = tpu.matmul %31, %28, %cst_12 {dimension_numbers = #tpu.dot_dimension_numbers<[1], [0], [0], [1], [0, 0, 1, 1], [], []>} : vector<8x8xf32>, vector<8x128xf32>, vector<8x128xf32> -> vector<8x128xf32>
    %c0_13 = arith.constant 0 : index
    %c0_14 = arith.constant 0 : index
    %c0_15 = arith.constant 0 : index
    %33 = vector.load %arg4[%c0_13, %c0_14, %c0_15] : memref<9x128x128xf32, #tpu.memory_space<vmem>>, vector<1x128x128xf32>
    %34 = vector.shape_cast %33 : vector<1x128x128xf32> to vector<128x128xf32>
    %cst_16 = arith.constant dense<0.000000e+00> : vector<8x128xf32>
    %35 = tpu.matmul %32, %34, %cst_16 {dimension_numbers = #tpu.dot_dimension_numbers<[1], [0], [0], [1], [0, 0, 1, 1], [], []>} : vector<8x128xf32>, vector<128x128xf32>, vector<8x128xf32> -> vector<8x128xf32>
    %36 = arith.addf %29, %35 : vector<8x128xf32>
    %c1 = arith.constant 1 : index
    %c0_17 = arith.constant 0 : index
    %c0_18 = arith.constant 0 : index
    %37 = vector.load %arg5[%c1, %c0_17, %c0_18] : memref<9x8x8xf32, #tpu.memory_space<vmem>>, vector<1x8x8xf32>
    %38 = vector.shape_cast %37 : vector<1x8x8xf32> to vector<8x8xf32>
    %cst_19 = arith.constant dense<0.000000e+00> : vector<8x128xf32>
    %39 = tpu.matmul %38, %28, %cst_19 {dimension_numbers = #tpu.dot_dimension_numbers<[1], [0], [0], [1], [0, 0, 1, 1], [], []>} : vector<8x8xf32>, vector<8x128xf32>, vector<8x128xf32> -> vector<8x128xf32>
    %c1_20 = arith.constant 1 : index
    %c0_21 = arith.constant 0 : index
    %c0_22 = arith.constant 0 : index
    %40 = vector.load %arg4[%c1_20, %c0_21, %c0_22] : memref<9x128x128xf32, #tpu.memory_space<vmem>>, vector<1x128x128xf32>
    %41 = vector.shape_cast %40 : vector<1x128x128xf32> to vector<128x128xf32>
    %cst_23 = arith.constant dense<0.000000e+00> : vector<8x128xf32>
    %42 = tpu.matmul %39, %41, %cst_23 {dimension_numbers = #tpu.dot_dimension_numbers<[1], [0], [0], [1], [0, 0, 1, 1], [], []>} : vector<8x128xf32>, vector<128x128xf32>, vector<8x128xf32> -> vector<8x128xf32>
    %43 = arith.addf %36, %42 : vector<8x128xf32>
    %c2 = arith.constant 2 : index
    %c0_24 = arith.constant 0 : index
    %c0_25 = arith.constant 0 : index
    %44 = vector.load %arg5[%c2, %c0_24, %c0_25] : memref<9x8x8xf32, #tpu.memory_space<vmem>>, vector<1x8x8xf32>
    %45 = vector.shape_cast %44 : vector<1x8x8xf32> to vector<8x8xf32>
    %cst_26 = arith.constant dense<0.000000e+00> : vector<8x128xf32>
    %46 = tpu.matmul %45, %28, %cst_26 {dimension_numbers = #tpu.dot_dimension_numbers<[1], [0], [0], [1], [0, 0, 1, 1], [], []>} : vector<8x8xf32>, vector<8x128xf32>, vector<8x128xf32> -> vector<8x128xf32>
    %c2_27 = arith.constant 2 : index
    %c0_28 = arith.constant 0 : index
    %c0_29 = arith.constant 0 : index
    %47 = vector.load %arg4[%c2_27, %c0_28, %c0_29] : memref<9x128x128xf32, #tpu.memory_space<vmem>>, vector<1x128x128xf32>
    %48 = vector.shape_cast %47 : vector<1x128x128xf32> to vector<128x128xf32>
    %cst_30 = arith.constant dense<0.000000e+00> : vector<8x128xf32>
    %49 = tpu.matmul %46, %48, %cst_30 {dimension_numbers = #tpu.dot_dimension_numbers<[1], [0], [0], [1], [0, 0, 1, 1], [], []>} : vector<8x128xf32>, vector<128x128xf32>, vector<8x128xf32> -> vector<8x128xf32>
    %50 = arith.addf %43, %49 : vector<8x128xf32>
    %c3 = arith.constant 3 : index
    %c0_31 = arith.constant 0 : index
    %c0_32 = arith.constant 0 : index
    %51 = vector.load %arg5[%c3, %c0_31, %c0_32] : memref<9x8x8xf32, #tpu.memory_space<vmem>>, vector<1x8x8xf32>
    %52 = vector.shape_cast %51 : vector<1x8x8xf32> to vector<8x8xf32>
    %cst_33 = arith.constant dense<0.000000e+00> : vector<8x128xf32>
    %53 = tpu.matmul %52, %28, %cst_33 {dimension_numbers = #tpu.dot_dimension_numbers<[1], [0], [0], [1], [0, 0, 1, 1], [], []>} : vector<8x8xf32>, vector<8x128xf32>, vector<8x128xf32> -> vector<8x128xf32>
    %c3_34 = arith.constant 3 : index
    %c0_35 = arith.constant 0 : index
    %c0_36 = arith.constant 0 : index
    %54 = vector.load %arg4[%c3_34, %c0_35, %c0_36] : memref<9x128x128xf32, #tpu.memory_space<vmem>>, vector<1x128x128xf32>
    %55 = vector.shape_cast %54 : vector<1x128x128xf32> to vector<128x128xf32>
    %cst_37 = arith.constant dense<0.000000e+00> : vector<8x128xf32>
    %56 = tpu.matmul %53, %55, %cst_37 {dimension_numbers = #tpu.dot_dimension_numbers<[1], [0], [0], [1], [0, 0, 1, 1], [], []>} : vector<8x128xf32>, vector<128x128xf32>, vector<8x128xf32> -> vector<8x128xf32>
    %57 = arith.addf %50, %56 : vector<8x128xf32>
    %c4 = arith.constant 4 : index
    %c0_38 = arith.constant 0 : index
    %c0_39 = arith.constant 0 : index
    %58 = vector.load %arg5[%c4, %c0_38, %c0_39] : memref<9x8x8xf32, #tpu.memory_space<vmem>>, vector<1x8x8xf32>
    %59 = vector.shape_cast %58 : vector<1x8x8xf32> to vector<8x8xf32>
    %cst_40 = arith.constant dense<0.000000e+00> : vector<8x128xf32>
    %60 = tpu.matmul %59, %28, %cst_40 {dimension_numbers = #tpu.dot_dimension_numbers<[1], [0], [0], [1], [0, 0, 1, 1], [], []>} : vector<8x8xf32>, vector<8x128xf32>, vector<8x128xf32> -> vector<8x128xf32>
    %c4_41 = arith.constant 4 : index
    %c0_42 = arith.constant 0 : index
    %c0_43 = arith.constant 0 : index
    %61 = vector.load %arg4[%c4_41, %c0_42, %c0_43] : memref<9x128x128xf32, #tpu.memory_space<vmem>>, vector<1x128x128xf32>
    %62 = vector.shape_cast %61 : vector<1x128x128xf32> to vector<128x128xf32>
    %cst_44 = arith.constant dense<0.000000e+00> : vector<8x128xf32>
    %63 = tpu.matmul %60, %62, %cst_44 {dimension_numbers = #tpu.dot_dimension_numbers<[1], [0], [0], [1], [0, 0, 1, 1], [], []>} : vector<8x128xf32>, vector<128x128xf32>, vector<8x128xf32> -> vector<8x128xf32>
    %64 = arith.addf %57, %63 : vector<8x128xf32>
    %c5 = arith.constant 5 : index
    %c0_45 = arith.constant 0 : index
    %c0_46 = arith.constant 0 : index
    %65 = vector.load %arg5[%c5, %c0_45, %c0_46] : memref<9x8x8xf32, #tpu.memory_space<vmem>>, vector<1x8x8xf32>
    %66 = vector.shape_cast %65 : vector<1x8x8xf32> to vector<8x8xf32>
    %cst_47 = arith.constant dense<0.000000e+00> : vector<8x128xf32>
    %67 = tpu.matmul %66, %28, %cst_47 {dimension_numbers = #tpu.dot_dimension_numbers<[1], [0], [0], [1], [0, 0, 1, 1], [], []>} : vector<8x8xf32>, vector<8x128xf32>, vector<8x128xf32> -> vector<8x128xf32>
    %c5_48 = arith.constant 5 : index
    %c0_49 = arith.constant 0 : index
    %c0_50 = arith.constant 0 : index
    %68 = vector.load %arg4[%c5_48, %c0_49, %c0_50] : memref<9x128x128xf32, #tpu.memory_space<vmem>>, vector<1x128x128xf32>
    %69 = vector.shape_cast %68 : vector<1x128x128xf32> to vector<128x128xf32>
    %cst_51 = arith.constant dense<0.000000e+00> : vector<8x128xf32>
    %70 = tpu.matmul %67, %69, %cst_51 {dimension_numbers = #tpu.dot_dimension_numbers<[1], [0], [0], [1], [0, 0, 1, 1], [], []>} : vector<8x128xf32>, vector<128x128xf32>, vector<8x128xf32> -> vector<8x128xf32>
    %71 = arith.addf %64, %70 : vector<8x128xf32>
    %c6 = arith.constant 6 : index
    %c0_52 = arith.constant 0 : index
    %c0_53 = arith.constant 0 : index
    %72 = vector.load %arg5[%c6, %c0_52, %c0_53] : memref<9x8x8xf32, #tpu.memory_space<vmem>>, vector<1x8x8xf32>
    %73 = vector.shape_cast %72 : vector<1x8x8xf32> to vector<8x8xf32>
    %cst_54 = arith.constant dense<0.000000e+00> : vector<8x128xf32>
    %74 = tpu.matmul %73, %28, %cst_54 {dimension_numbers = #tpu.dot_dimension_numbers<[1], [0], [0], [1], [0, 0, 1, 1], [], []>} : vector<8x8xf32>, vector<8x128xf32>, vector<8x128xf32> -> vector<8x128xf32>
    %c6_55 = arith.constant 6 : index
    %c0_56 = arith.constant 0 : index
    %c0_57 = arith.constant 0 : index
    %75 = vector.load %arg4[%c6_55, %c0_56, %c0_57] : memref<9x128x128xf32, #tpu.memory_space<vmem>>, vector<1x128x128xf32>
    %76 = vector.shape_cast %75 : vector<1x128x128xf32> to vector<128x128xf32>
    %cst_58 = arith.constant dense<0.000000e+00> : vector<8x128xf32>
    %77 = tpu.matmul %74, %76, %cst_58 {dimension_numbers = #tpu.dot_dimension_numbers<[1], [0], [0], [1], [0, 0, 1, 1], [], []>} : vector<8x128xf32>, vector<128x128xf32>, vector<8x128xf32> -> vector<8x128xf32>
    %78 = arith.addf %71, %77 : vector<8x128xf32>
    %c7 = arith.constant 7 : index
    %c0_59 = arith.constant 0 : index
    %c0_60 = arith.constant 0 : index
    %79 = vector.load %arg5[%c7, %c0_59, %c0_60] : memref<9x8x8xf32, #tpu.memory_space<vmem>>, vector<1x8x8xf32>
    %80 = vector.shape_cast %79 : vector<1x8x8xf32> to vector<8x8xf32>
    %cst_61 = arith.constant dense<0.000000e+00> : vector<8x128xf32>
    %81 = tpu.matmul %80, %28, %cst_61 {dimension_numbers = #tpu.dot_dimension_numbers<[1], [0], [0], [1], [0, 0, 1, 1], [], []>} : vector<8x8xf32>, vector<8x128xf32>, vector<8x128xf32> -> vector<8x128xf32>
    %c7_62 = arith.constant 7 : index
    %c0_63 = arith.constant 0 : index
    %c0_64 = arith.constant 0 : index
    %82 = vector.load %arg4[%c7_62, %c0_63, %c0_64] : memref<9x128x128xf32, #tpu.memory_space<vmem>>, vector<1x128x128xf32>
    %83 = vector.shape_cast %82 : vector<1x128x128xf32> to vector<128x128xf32>
    %cst_65 = arith.constant dense<0.000000e+00> : vector<8x128xf32>
    %84 = tpu.matmul %81, %83, %cst_65 {dimension_numbers = #tpu.dot_dimension_numbers<[1], [0], [0], [1], [0, 0, 1, 1], [], []>} : vector<8x128xf32>, vector<128x128xf32>, vector<8x128xf32> -> vector<8x128xf32>
    %85 = arith.addf %78, %84 : vector<8x128xf32>
    %c8 = arith.constant 8 : index
    %c0_66 = arith.constant 0 : index
    %c0_67 = arith.constant 0 : index
    %86 = vector.load %arg5[%c8, %c0_66, %c0_67] : memref<9x8x8xf32, #tpu.memory_space<vmem>>, vector<1x8x8xf32>
    %87 = vector.shape_cast %86 : vector<1x8x8xf32> to vector<8x8xf32>
    %cst_68 = arith.constant dense<0.000000e+00> : vector<8x128xf32>
    %88 = tpu.matmul %87, %28, %cst_68 {dimension_numbers = #tpu.dot_dimension_numbers<[1], [0], [0], [1], [0, 0, 1, 1], [], []>} : vector<8x8xf32>, vector<8x128xf32>, vector<8x128xf32> -> vector<8x128xf32>
    %c8_69 = arith.constant 8 : index
    %c0_70 = arith.constant 0 : index
    %c0_71 = arith.constant 0 : index
    %89 = vector.load %arg4[%c8_69, %c0_70, %c0_71] : memref<9x128x128xf32, #tpu.memory_space<vmem>>, vector<1x128x128xf32>
    %90 = vector.shape_cast %89 : vector<1x128x128xf32> to vector<128x128xf32>
    %cst_72 = arith.constant dense<0.000000e+00> : vector<8x128xf32>
    %91 = tpu.matmul %88, %90, %cst_72 {dimension_numbers = #tpu.dot_dimension_numbers<[1], [0], [0], [1], [0, 0, 1, 1], [], []>} : vector<8x128xf32>, vector<128x128xf32>, vector<8x128xf32> -> vector<8x128xf32>
    %92 = arith.addf %85, %91 : vector<8x128xf32>
    %c0_73 = arith.constant 0 : index
    %c0_74 = arith.constant 0 : index
    %93 = vector.load %arg2[%c0_73, %c0_74] : memref<4x512xf32, #tpu.memory_space<vmem>>, vector<4x512xf32>
    %c0_75 = arith.constant 0 : index
    %c0_76 = arith.constant 0 : index
    %94 = vector.load %arg3[%c0_75, %c0_76] : memref<512x128xf32, #tpu.memory_space<vmem>>, vector<512x128xf32>
    %cst_77 = arith.constant dense<0.000000e+00> : vector<4x128xf32>
    %95 = tpu.matmul %93, %94, %cst_77 {dimension_numbers = #tpu.dot_dimension_numbers<[1], [0], [0], [1], [0, 0, 1, 1], [], []>} : vector<4x512xf32>, vector<512x128xf32>, vector<4x128xf32> -> vector<4x128xf32>
    %cst_78 = arith.constant 0.000000e+00 : f32
    %96 = vector.broadcast %cst_78 : f32 to vector<8x128xf32>
    %c0_79 = arith.constant 0 : index
    %c0_80 = arith.constant 0 : index
    %c0_81 = arith.constant 0 : index
    %97 = vector.load %arg6[%c0_79, %c0_80, %c0_81] : memref<9x8x4xf32, #tpu.memory_space<vmem>>, vector<1x8x4xf32>
    %98 = vector.shape_cast %97 : vector<1x8x4xf32> to vector<8x4xf32>
    %cst_82 = arith.constant dense<0.000000e+00> : vector<8x128xf32>
    %99 = tpu.matmul %98, %95, %cst_82 {dimension_numbers = #tpu.dot_dimension_numbers<[1], [0], [0], [1], [0, 0, 1, 1], [], []>} : vector<8x4xf32>, vector<4x128xf32>, vector<8x128xf32> -> vector<8x128xf32>
    %c0_83 = arith.constant 0 : index
    %c0_84 = arith.constant 0 : index
    %c0_85 = arith.constant 0 : index
    %100 = vector.load %arg4[%c0_83, %c0_84, %c0_85] : memref<9x128x128xf32, #tpu.memory_space<vmem>>, vector<1x128x128xf32>
    %101 = vector.shape_cast %100 : vector<1x128x128xf32> to vector<128x128xf32>
    %cst_86 = arith.constant dense<0.000000e+00> : vector<8x128xf32>
    %102 = tpu.matmul %99, %101, %cst_86 {dimension_numbers = #tpu.dot_dimension_numbers<[1], [0], [0], [1], [0, 0, 1, 1], [], []>} : vector<8x128xf32>, vector<128x128xf32>, vector<8x128xf32> -> vector<8x128xf32>
    %103 = arith.addf %96, %102 : vector<8x128xf32>
    %c1_87 = arith.constant 1 : index
    %c0_88 = arith.constant 0 : index
    %c0_89 = arith.constant 0 : index
    %104 = vector.load %arg6[%c1_87, %c0_88, %c0_89] : memref<9x8x4xf32, #tpu.memory_space<vmem>>, vector<1x8x4xf32>
    %105 = vector.shape_cast %104 : vector<1x8x4xf32> to vector<8x4xf32>
    %cst_90 = arith.constant dense<0.000000e+00> : vector<8x128xf32>
    %106 = tpu.matmul %105, %95, %cst_90 {dimension_numbers = #tpu.dot_dimension_numbers<[1], [0], [0], [1], [0, 0, 1, 1], [], []>} : vector<8x4xf32>, vector<4x128xf32>, vector<8x128xf32> -> vector<8x128xf32>
    %c1_91 = arith.constant 1 : index
    %c0_92 = arith.constant 0 : index
    %c0_93 = arith.constant 0 : index
    %107 = vector.load %arg4[%c1_91, %c0_92, %c0_93] : memref<9x128x128xf32, #tpu.memory_space<vmem>>, vector<1x128x128xf32>
    %108 = vector.shape_cast %107 : vector<1x128x128xf32> to vector<128x128xf32>
    %cst_94 = arith.constant dense<0.000000e+00> : vector<8x128xf32>
    %109 = tpu.matmul %106, %108, %cst_94 {dimension_numbers = #tpu.dot_dimension_numbers<[1], [0], [0], [1], [0, 0, 1, 1], [], []>} : vector<8x128xf32>, vector<128x128xf32>, vector<8x128xf32> -> vector<8x128xf32>
    %110 = arith.addf %103, %109 : vector<8x128xf32>
    %c2_95 = arith.constant 2 : index
    %c0_96 = arith.constant 0 : index
    %c0_97 = arith.constant 0 : index
    %111 = vector.load %arg6[%c2_95, %c0_96, %c0_97] : memref<9x8x4xf32, #tpu.memory_space<vmem>>, vector<1x8x4xf32>
    %112 = vector.shape_cast %111 : vector<1x8x4xf32> to vector<8x4xf32>
    %cst_98 = arith.constant dense<0.000000e+00> : vector<8x128xf32>
    %113 = tpu.matmul %112, %95, %cst_98 {dimension_numbers = #tpu.dot_dimension_numbers<[1], [0], [0], [1], [0, 0, 1, 1], [], []>} : vector<8x4xf32>, vector<4x128xf32>, vector<8x128xf32> -> vector<8x128xf32>
    %c2_99 = arith.constant 2 : index
    %c0_100 = arith.constant 0 : index
    %c0_101 = arith.constant 0 : index
    %114 = vector.load %arg4[%c2_99, %c0_100, %c0_101] : memref<9x128x128xf32, #tpu.memory_space<vmem>>, vector<1x128x128xf32>
    %115 = vector.shape_cast %114 : vector<1x128x128xf32> to vector<128x128xf32>
    %cst_102 = arith.constant dense<0.000000e+00> : vector<8x128xf32>
    %116 = tpu.matmul %113, %115, %cst_102 {dimension_numbers = #tpu.dot_dimension_numbers<[1], [0], [0], [1], [0, 0, 1, 1], [], []>} : vector<8x128xf32>, vector<128x128xf32>, vector<8x128xf32> -> vector<8x128xf32>
    %117 = arith.addf %110, %116 : vector<8x128xf32>
    %c3_103 = arith.constant 3 : index
    %c0_104 = arith.constant 0 : index
    %c0_105 = arith.constant 0 : index
    %118 = vector.load %arg6[%c3_103, %c0_104, %c0_105] : memref<9x8x4xf32, #tpu.memory_space<vmem>>, vector<1x8x4xf32>
    %119 = vector.shape_cast %118 : vector<1x8x4xf32> to vector<8x4xf32>
    %cst_106 = arith.constant dense<0.000000e+00> : vector<8x128xf32>
    %120 = tpu.matmul %119, %95, %cst_106 {dimension_numbers = #tpu.dot_dimension_numbers<[1], [0], [0], [1], [0, 0, 1, 1], [], []>} : vector<8x4xf32>, vector<4x128xf32>, vector<8x128xf32> -> vector<8x128xf32>
    %c3_107 = arith.constant 3 : index
    %c0_108 = arith.constant 0 : index
    %c0_109 = arith.constant 0 : index
    %121 = vector.load %arg4[%c3_107, %c0_108, %c0_109] : memref<9x128x128xf32, #tpu.memory_space<vmem>>, vector<1x128x128xf32>
    %122 = vector.shape_cast %121 : vector<1x128x128xf32> to vector<128x128xf32>
    %cst_110 = arith.constant dense<0.000000e+00> : vector<8x128xf32>
    %123 = tpu.matmul %120, %122, %cst_110 {dimension_numbers = #tpu.dot_dimension_numbers<[1], [0], [0], [1], [0, 0, 1, 1], [], []>} : vector<8x128xf32>, vector<128x128xf32>, vector<8x128xf32> -> vector<8x128xf32>
    %124 = arith.addf %117, %123 : vector<8x128xf32>
    %c4_111 = arith.constant 4 : index
    %c0_112 = arith.constant 0 : index
    %c0_113 = arith.constant 0 : index
    %125 = vector.load %arg6[%c4_111, %c0_112, %c0_113] : memref<9x8x4xf32, #tpu.memory_space<vmem>>, vector<1x8x4xf32>
    %126 = vector.shape_cast %125 : vector<1x8x4xf32> to vector<8x4xf32>
    %cst_114 = arith.constant dense<0.000000e+00> : vector<8x128xf32>
    %127 = tpu.matmul %126, %95, %cst_114 {dimension_numbers = #tpu.dot_dimension_numbers<[1], [0], [0], [1], [0, 0, 1, 1], [], []>} : vector<8x4xf32>, vector<4x128xf32>, vector<8x128xf32> -> vector<8x128xf32>
    %c4_115 = arith.constant 4 : index
    %c0_116 = arith.constant 0 : index
    %c0_117 = arith.constant 0 : index
    %128 = vector.load %arg4[%c4_115, %c0_116, %c0_117] : memref<9x128x128xf32, #tpu.memory_space<vmem>>, vector<1x128x128xf32>
    %129 = vector.shape_cast %128 : vector<1x128x128xf32> to vector<128x128xf32>
    %cst_118 = arith.constant dense<0.000000e+00> : vector<8x128xf32>
    %130 = tpu.matmul %127, %129, %cst_118 {dimension_numbers = #tpu.dot_dimension_numbers<[1], [0], [0], [1], [0, 0, 1, 1], [], []>} : vector<8x128xf32>, vector<128x128xf32>, vector<8x128xf32> -> vector<8x128xf32>
    %131 = arith.addf %124, %130 : vector<8x128xf32>
    %c5_119 = arith.constant 5 : index
    %c0_120 = arith.constant 0 : index
    %c0_121 = arith.constant 0 : index
    %132 = vector.load %arg6[%c5_119, %c0_120, %c0_121] : memref<9x8x4xf32, #tpu.memory_space<vmem>>, vector<1x8x4xf32>
    %133 = vector.shape_cast %132 : vector<1x8x4xf32> to vector<8x4xf32>
    %cst_122 = arith.constant dense<0.000000e+00> : vector<8x128xf32>
    %134 = tpu.matmul %133, %95, %cst_122 {dimension_numbers = #tpu.dot_dimension_numbers<[1], [0], [0], [1], [0, 0, 1, 1], [], []>} : vector<8x4xf32>, vector<4x128xf32>, vector<8x128xf32> -> vector<8x128xf32>
    %c5_123 = arith.constant 5 : index
    %c0_124 = arith.constant 0 : index
    %c0_125 = arith.constant 0 : index
    %135 = vector.load %arg4[%c5_123, %c0_124, %c0_125] : memref<9x128x128xf32, #tpu.memory_space<vmem>>, vector<1x128x128xf32>
    %136 = vector.shape_cast %135 : vector<1x128x128xf32> to vector<128x128xf32>
    %cst_126 = arith.constant dense<0.000000e+00> : vector<8x128xf32>
    %137 = tpu.matmul %134, %136, %cst_126 {dimension_numbers = #tpu.dot_dimension_numbers<[1], [0], [0], [1], [0, 0, 1, 1], [], []>} : vector<8x128xf32>, vector<128x128xf32>, vector<8x128xf32> -> vector<8x128xf32>
    %138 = arith.addf %131, %137 : vector<8x128xf32>
    %c6_127 = arith.constant 6 : index
    %c0_128 = arith.constant 0 : index
    %c0_129 = arith.constant 0 : index
    %139 = vector.load %arg6[%c6_127, %c0_128, %c0_129] : memref<9x8x4xf32, #tpu.memory_space<vmem>>, vector<1x8x4xf32>
    %140 = vector.shape_cast %139 : vector<1x8x4xf32> to vector<8x4xf32>
    %cst_130 = arith.constant dense<0.000000e+00> : vector<8x128xf32>
    %141 = tpu.matmul %140, %95, %cst_130 {dimension_numbers = #tpu.dot_dimension_numbers<[1], [0], [0], [1], [0, 0, 1, 1], [], []>} : vector<8x4xf32>, vector<4x128xf32>, vector<8x128xf32> -> vector<8x128xf32>
    %c6_131 = arith.constant 6 : index
    %c0_132 = arith.constant 0 : index
    %c0_133 = arith.constant 0 : index
    %142 = vector.load %arg4[%c6_131, %c0_132, %c0_133] : memref<9x128x128xf32, #tpu.memory_space<vmem>>, vector<1x128x128xf32>
    %143 = vector.shape_cast %142 : vector<1x128x128xf32> to vector<128x128xf32>
    %cst_134 = arith.constant dense<0.000000e+00> : vector<8x128xf32>
    %144 = tpu.matmul %141, %143, %cst_134 {dimension_numbers = #tpu.dot_dimension_numbers<[1], [0], [0], [1], [0, 0, 1, 1], [], []>} : vector<8x128xf32>, vector<128x128xf32>, vector<8x128xf32> -> vector<8x128xf32>
    %145 = arith.addf %138, %144 : vector<8x128xf32>
    %c7_135 = arith.constant 7 : index
    %c0_136 = arith.constant 0 : index
    %c0_137 = arith.constant 0 : index
    %146 = vector.load %arg6[%c7_135, %c0_136, %c0_137] : memref<9x8x4xf32, #tpu.memory_space<vmem>>, vector<1x8x4xf32>
    %147 = vector.shape_cast %146 : vector<1x8x4xf32> to vector<8x4xf32>
    %cst_138 = arith.constant dense<0.000000e+00> : vector<8x128xf32>
    %148 = tpu.matmul %147, %95, %cst_138 {dimension_numbers = #tpu.dot_dimension_numbers<[1], [0], [0], [1], [0, 0, 1, 1], [], []>} : vector<8x4xf32>, vector<4x128xf32>, vector<8x128xf32> -> vector<8x128xf32>
    %c7_139 = arith.constant 7 : index
    %c0_140 = arith.constant 0 : index
    %c0_141 = arith.constant 0 : index
    %149 = vector.load %arg4[%c7_139, %c0_140, %c0_141] : memref<9x128x128xf32, #tpu.memory_space<vmem>>, vector<1x128x128xf32>
    %150 = vector.shape_cast %149 : vector<1x128x128xf32> to vector<128x128xf32>
    %cst_142 = arith.constant dense<0.000000e+00> : vector<8x128xf32>
    %151 = tpu.matmul %148, %150, %cst_142 {dimension_numbers = #tpu.dot_dimension_numbers<[1], [0], [0], [1], [0, 0, 1, 1], [], []>} : vector<8x128xf32>, vector<128x128xf32>, vector<8x128xf32> -> vector<8x128xf32>
    %152 = arith.addf %145, %151 : vector<8x128xf32>
    %c8_143 = arith.constant 8 : index
    %c0_144 = arith.constant 0 : index
    %c0_145 = arith.constant 0 : index
    %153 = vector.load %arg6[%c8_143, %c0_144, %c0_145] : memref<9x8x4xf32, #tpu.memory_space<vmem>>, vector<1x8x4xf32>
    %154 = vector.shape_cast %153 : vector<1x8x4xf32> to vector<8x4xf32>
    %cst_146 = arith.constant dense<0.000000e+00> : vector<8x128xf32>
    %155 = tpu.matmul %154, %95, %cst_146 {dimension_numbers = #tpu.dot_dimension_numbers<[1], [0], [0], [1], [0, 0, 1, 1], [], []>} : vector<8x4xf32>, vector<4x128xf32>, vector<8x128xf32> -> vector<8x128xf32>
    %c8_147 = arith.constant 8 : index
    %c0_148 = arith.constant 0 : index
    %c0_149 = arith.constant 0 : index
    %156 = vector.load %arg4[%c8_147, %c0_148, %c0_149] : memref<9x128x128xf32, #tpu.memory_space<vmem>>, vector<1x128x128xf32>
    %157 = vector.shape_cast %156 : vector<1x128x128xf32> to vector<128x128xf32>
    %cst_150 = arith.constant dense<0.000000e+00> : vector<8x128xf32>
    %158 = tpu.matmul %155, %157, %cst_150 {dimension_numbers = #tpu.dot_dimension_numbers<[1], [0], [0], [1], [0, 0, 1, 1], [], []>} : vector<8x128xf32>, vector<128x128xf32>, vector<8x128xf32> -> vector<8x128xf32>
    %159 = arith.addf %152, %158 : vector<8x128xf32>
    %160 = arith.addf %92, %159 : vector<8x128xf32>
    %161 = arith.mulf %160, %160 : vector<8x128xf32>
    %cst_151 = arith.constant dense<0.000000e+00> : vector<128xf32>
    %162 = vector.multi_reduction <add>, %161, %cst_151 [0] : vector<8x128xf32> to vector<128xf32>
    %163 = vector.shape_cast %162 : vector<128xf32> to vector<1x128xf32>
    %cst_152 = arith.constant 8.000000e+00 : f32
    %164 = vector.broadcast %cst_152 : f32 to vector<1x128xf32>
    %165 = arith.divf %163, %164 : vector<1x128xf32>
    %cst_153 = arith.constant 9.99999993E-9 : f32
    %166 = vector.broadcast %cst_153 : f32 to vector<1x128xf32>
    %167 = arith.addf %165, %166 : vector<1x128xf32>
    %168 = math.rsqrt %167 : vector<1x128xf32>
    %169 = vector.broadcast %168 : vector<1x128xf32> to vector<8x128xf32>
    %170 = arith.mulf %160, %169 : vector<8x128xf32>
    %cst_154 = arith.constant 0.000000e+00 : f32
    %171 = vector.broadcast %cst_154 : f32 to vector<8x128xf32>
    %172 = arith.maximumf %170, %171 : vector<8x128xf32>
    %173 = vector.broadcast %cst_154 : f32 to vector<8x128xf32>
    %174 = arith.subf %170, %173 : vector<8x128xf32>
    %175 = arith.cmpf one, %174, %174 : vector<8x128xf32>
    %176 = vector.broadcast %cst_154 : f32 to vector<8x128xf32>
    %177 = arith.addf %170, %176 : vector<8x128xf32>
    %178 = math.absf %174 : vector<8x128xf32>
    %cst_155 = arith.constant 0.000000e+00 : f32
    %179 = vector.broadcast %cst_155 : f32 to vector<8x128xf32>
    %180 = arith.subf %179, %178 : vector<8x128xf32>
    %181 = math.exp %180 : vector<8x128xf32>
    %182 = math.log1p %181 : vector<8x128xf32>
    %183 = arith.addf %172, %182 : vector<8x128xf32>
    %184 = arith.select %175, %177, %183 : vector<8x128xi1>, vector<8x128xf32>
    %185 = math.tanh %184 : vector<8x128xf32>
    %186 = arith.mulf %170, %185 : vector<8x128xf32>
    %c0_156 = arith.constant 0 : index
    %c0_157 = arith.constant 0 : index
    %187 = vector.load %arg7[%c0_156, %c0_157] : memref<8x128xf32, #tpu.memory_space<vmem>>, vector<8x128xf32>
    tpu.vector_store %arg7[%c0_156, %c0_157], %186 {strides = array<i32>} : memref<8x128xf32, #tpu.memory_space<vmem>>, vector<8x128xf32>,
    return
  }
}

</mosaic_0001>

<llo_original>
// kernel: discriminator_block.1
$region0: #{discriminator_block.1}
  #allocation0 [shape = 'u32[]', space=smem, size = 0x4, offset = 0x4, fixed_abs, tag = 'smem constant byte address 0x4 - core index']
  #allocation1 [shape = 'u32[72,128]{1,0:T(1,128)}', space=vmem, size = 0x9000, scoped, tag = 'internal scratch']
  %s0 = inlined_call_operand.vmem [shape: f32[64,128], index: 0, kind: input, shape index: {}]
  %s1 = inlined_call_operand.vmem [shape: f32[8,64], index: 1, kind: input, shape index: {}]
  %s2 = inlined_call_operand.vmem [shape: f32[4,512], index: 2, kind: input, shape index: {}]
  %s3 = inlined_call_operand.vmem [shape: f32[512,128], index: 3, kind: input, shape index: {}]
  %s4 = inlined_call_operand.vmem [shape: f32[9,128,128], index: 4, kind: input, shape index: {}]
  %s5 = inlined_call_operand.vmem [shape: f32[9,8,8], index: 5, kind: input, shape index: {}]
  %s6 = inlined_call_operand.vmem [shape: f32[9,8,4], index: 6, kind: input, shape index: {}]
  %s7 = inlined_call_operand.vmem [shape: f32[8,128], index: 7, kind: output, shape index: {}]
  %s8 = sld [smem:[#allocation0]]
  $region38: #{discriminator_block.1} parent=0
    _
  %s10 = ssub.s32 1, %s8
  %s11 = scalar_select 0, %s10, %s8
  // Predicated region
  $region2: #{discriminator_block.1} parent=0 // pred_check
    _
  $region3: #{discriminator_block.1} parent=0 // pred_check_branch
    %13 = sbr.rel (0) target = $region5
  $region4: #{discriminator_block.1} parent=0 // pred_region
    _
  $region5: #{discriminator_block.1} parent=0 // pred_fallthru
    _
  // Predicated region
  $region6: #{discriminator_block.1} parent=0 // pred_check
    _
  $region7: #{discriminator_block.1} parent=0 // pred_check_branch
    %15 = sbr.rel (0) target = $region9
  $region8: #{discriminator_block.1} parent=0 // pred_region
    _
  $region9: #{discriminator_block.1} parent=0 // pred_fallthru
    _
  // Predicated region
  $region10: #{discriminator_block.1} parent=0 // pred_check
    _
  $region11: #{discriminator_block.1} parent=0 // pred_check_branch
    %17 = sbr.rel (0) target = $region13
  $region12: #{discriminator_block.1} parent=0 // pred_region
    _
  $region13: #{discriminator_block.1} parent=0 // pred_fallthru
    _
  // Predicated region
  $region14: #{discriminator_block.1} parent=0 // pred_check
    _
  $region15: #{discriminator_block.1} parent=0 // pred_check_branch
    %19 = sbr.rel (0) target = $region17
  $region16: #{discriminator_block.1} parent=0 // pred_region
    _
  $region17: #{discriminator_block.1} parent=0 // pred_fallthru
    _
  // Predicated region
  $region18: #{discriminator_block.1} parent=0 // pred_check
    _
  $region19: #{discriminator_block.1} parent=0 // pred_check_branch
    %21 = sbr.rel (0) target = $region21
  $region20: #{discriminator_block.1} parent=0 // pred_region
    _
  $region21: #{discriminator_block.1} parent=0 // pred_fallthru
    _
  // Predicated region
  $region22: #{discriminator_block.1} parent=0 // pred_check
    _
  $region23: #{discriminator_block.1} parent=0 // pred_check_branch
    %23 = sbr.rel (0) target = $region25
  $region24: #{discriminator_block.1} parent=0 // pred_region
    _
  $region25: #{discriminator_block.1} parent=0 // pred_fallthru
    _
  // Predicated region
  $region26: #{discriminator_block.1} parent=0 // pred_check
    _
  $region27: #{discriminator_block.1} parent=0 // pred_check_branch
    %25 = sbr.rel (0) target = $region29
  $region28: #{discriminator_block.1} parent=0 // pred_region
    _
  $region29: #{discriminator_block.1} parent=0 // pred_fallthru
    _
  %v26 = vld [vmem:[%s1] sm:$0xff]
  %v27 = vld [vmem:[%s0] sm:$0xff]
  %v28 = vld [vmem:[%s0 + $0x8] sm:$0xff]
  %v29 = vld [vmem:[%s0 + $0x10] sm:$0xff]
  %v30 = vld [vmem:[%s0 + $0x18] sm:$0xff]
  %v31 = vld [vmem:[%s0 + $0x20] sm:$0xff]
  %v32 = vld [vmem:[%s0 + $0x28] sm:$0xff]
  %v33 = vld [vmem:[%s0 + $0x30] sm:$0xff]
  %v34 = vld [vmem:[%s0 + $0x38] sm:$0xff]
  %vm35 = vcmask 523264
  %v37 = vsel %vm35, %v26, 0
  %39 = vmatpush.msra.mxu0 0.0
  %40 = vmatpush.msra.mxu0 0.0
  %41 = vmatpush.msra.mxu0 0.0
  %42 = vmatpush.msra.mxu0 0.0
  %43 = vmatpush.msra.mxu0 0.0
  %44 = vmatpush.msra.mxu0 0.0
  %45 = vmatpush.msra.mxu0 0.0
  %46 = vmatpush.msra.mxu0 0.0
  %47 = vmatpush.msra.mxu0 %v34
  %48 = vmatpush.msra.mxu0 %v33
  %49 = vmatpush.msra.mxu0 %v32
  %50 = vmatpush.msra.mxu0 %v31
  %51 = vmatpush.msra.mxu0 %v30
  %52 = vmatpush.msra.mxu0 %v29
  %53 = vmatpush.msra.mxu0 %v28
  %54 = vmatpush.msra.mxu0 %v27
  %55 = vmatmul.f32.gmra.mxu0 %v37
  %v56 = vpop.f32.mrf.mxu0
  %v57 = vadd.f32 0.0, %v56
  %58 = vdwg.mxu0
  %v59 = vmul.f32 %v57, %v57
  %v60 = vrot.slane %v59, 4
  %v61 = vadd.f32 %v59, %v60
  %v62 = vrot.slane %v61, 2
  %v63 = vadd.f32 %v61, %v62
  %v64 = vrot.slane %v63, 1
  %v65 = vadd.f32 %v63, %v64
  %v66 = vrcp.pop 8.0
  %v67 = vmul.f32 8.0, %v66
  %v68 = vsub.f32 1.0, %v67
  %v69 = vmul.f32 %v66, %v68
  %v70 = vadd.f32 %v66, %v69
  %vm71 = vweird.f32 %v66
  %v72 = vsel %vm71, %v66, %v70
  %v73 = vmul.f32 %v65, %v72
  %v74 = vadd.f32 %v73, 1e-08
  %v75 = vrsqrt.pop %v74
  %v76 = vmul.f32 %v75, %v74
  %v77 = vmul.f32 %v76, %v75
  %v78 = vmul.f32 0.5, %v77
  %v79 = vsub.f32 1.5, %v78
  %v80 = vmul.f32 %v75, %v79
  %vm81 = vweird.f32 %v74
  %vm82 = vweird.f32 %v75
  %vm83 = vmor %vm81, %vm82
  %v84 = vsel %vm83, %v75, %v80
  %v85 = vmul.f32 %v57, %v84
  %v86 = vmax.f32 %v85, 0.0
  %vm87 = vcmp.ne.f32.partialorder %v85, %v85
  %v88 = vadd.f32 %v85, 0.0
  %v89 = vand.u32 2147483647, %v85
  %v90 = vsub.f32 0.0, %v89
  %v91 = vmul.f32 %v90, 1.442695
  %v92 = vpow.pop %v91
  %v93 = vadd.f32 %v92, 1.0
  %v94 = vlog2.pop %v93
  %v95 = vmul.f32 %v94, 0.6931472
  %v96 = vmul.f32 -0.5, %v92
  %v97 = vadd.f32 %v96, 1.0
  %v98 = vmul.f32 %v97, %v92
  %v99 = vand.u32 2147483647, %v92
  %vm100 = vcmp.lt.f32.partialorder %v99, 0.0004427343
  %v101 = vsel %vm100, %v98, %v95
  %v102 = vadd.f32 %v86, %v101
  %v103 = vsel %vm87, %v88, %v102
  %v104 = vtanh.pop %v103
  %v105 = vmul.f32 %v85, %v104
  %v106 = vld [vmem:[%s5] sm:$0xff]
  %vm107 = vcmask 64512
  %v109 = vsel %vm107, %v106, 0
  %111 = vmatpush.msra.mxu0 0.0
  %112 = vmatpush.msra.mxu0 0.0
  %113 = vmatpush.msra.mxu0 0.0
  %114 = vmatpush.msra.mxu0 0.0
  %115 = vmatpush.msra.mxu0 0.0
  %116 = vmatpush.msra.mxu0 0.0
  %117 = vmatpush.msra.mxu0 0.0
  %118 = vmatpush.msra.mxu0 0.0
  %119 = vmatpush.msra.mxu0 0.0
  %120 = vmatpush.msra.mxu0 0.0
  %121 = vmatpush.msra.mxu0 0.0
  %122 = vmatpush.msra.mxu0 0.0
  %123 = vmatpush.msra.mxu0 0.0
  %124 = vmatpush.msra.mxu0 0.0
  %125 = vmatpush.msra.mxu0 0.0
  %126 = vmatpush.msra.mxu0 %v105
  %127 = vmatmul.f32.gmra.mxu0 %v109
  %v128 = vpop.f32.mrf.mxu0
  %v129 = vadd.f32 0.0, %v128
  %130 = vdwg.mxu0
  %v131 = vld [vmem:[%s4] sm:$0xff]
  %v132 = vld [vmem:[%s4 + $0x8] sm:$0xff]
  %v133 = vld [vmem:[%s4 + $0x10] sm:$0xff]
  %v134 = vld [vmem:[%s4 + $0x18] sm:$0xff]
  %v135 = vld [vmem:[%s4 + $0x20] sm:$0xff]
  %v136 = vld [vmem:[%s4 + $0x28] sm:$0xff]
  %v137 = vld [vmem:[%s4 + $0x30] sm:$0xff]
  %v138 = vld [vmem:[%s4 + $0x38] sm:$0xff]
  %v139 = vld [vmem:[%s4 + $0x40] sm:$0xff]
  %v140 = vld [vmem:[%s4 + $0x48] sm:$0xff]
  %v141 = vld [vmem:[%s4 + $0x50] sm:$0xff]
  %v142 = vld [vmem:[%s4 + $0x58] sm:$0xff]
  %v143 = vld [vmem:[%s4 + $0x60] sm:$0xff]
  %v144 = vld [vmem:[%s4 + $0x68] sm:$0xff]
  %v145 = vld [vmem:[%s4 + $0x70] sm:$0xff]
  %v146 = vld [vmem:[%s4 + $0x78] sm:$0xff]
  %s147 = scalar_lea.vmem %s5, 8
  %v148 = vld [vmem:[%s147] sm:$0xff]
  %v150 = vsel %vm107, %v148, 0
  %152 = vmatpush.msra.mxu0 0.0
  %153 = vmatpush.msra.mxu0 0.0
  %154 = vmatpush.msra.mxu0 0.0
  %155 = vmatpush.msra.mxu0 0.0
  %156 = vmatpush.msra.mxu0 0.0
  %157 = vmatpush.msra.mxu0 0.0
  %158 = vmatpush.msra.mxu0 0.0
  %159 = vmatpush.msra.mxu0 0.0
  %160 = vmatpush.msra.mxu0 0.0
  %161 = vmatpush.msra.mxu0 0.0
  %162 = vmatpush.msra.mxu0 0.0
  %163 = vmatpush.msra.mxu0 0.0
  %164 = vmatpush.msra.mxu0 0.0
  %165 = vmatpush.msra.mxu0 0.0
  %166 = vmatpush.msra.mxu0 0.0
  %167 = vmatpush.msra.mxu0 %v105
  %168 = vmatmul.f32.gmra.mxu0 %v150
  %v169 = vpop.f32.mrf.mxu0
  %v170 = vadd.f32 0.0, %v169
  %171 = vdwg.mxu0
  %s172 = scalar_lea.vmem %s4, 128
  %v173 = vld [vmem:[%s172] sm:$0xff]
  %v174 = vld [vmem:[%s172 + $0x8] sm:$0xff]
  %v175 = vld [vmem:[%s172 + $0x10] sm:$0xff]
  %v176 = vld [vmem:[%s172 + $0x18] sm:$0xff]
  %v177 = vld [vmem:[%s172 + $0x20] sm:$0xff]
  %v178 = vld [vmem:[%s172 + $0x28] sm:$0xff]
  %v179 = vld [vmem:[%s172 + $0x30] sm:$0xff]
  %v180 = vld [vmem:[%s172 + $0x38] sm:$0xff]
  %v181 = vld [vmem:[%s172 + $0x40] sm:$0xff]
  %v182 = vld [vmem:[%s172 + $0x48] sm:$0xff]
  %v183 = vld [vmem:[%s172 + $0x50] sm:$0xff]
  %v184 = vld [vmem:[%s172 + $0x58] sm:$0xff]
  %v185 = vld [vmem:[%s172 + $0x60] sm:$0xff]
  %v186 = vld [vmem:[%s172 + $0x68] sm:$0xff]
  %v187 = vld [vmem:[%s172 + $0x70] sm:$0xff]
  %v188 = vld [vmem:[%s172 + $0x78] sm:$0xff]
  %189 = vmatpush.msra.mxu0 %v188
  %190 = vmatpush.msra.mxu0 %v187
  %191 = vmatpush.msra.mxu0 %v186
  %192 = vmatpush.msra.mxu0 %v185
  %193 = vmatpush.msra.mxu0 %v184
  %194 = vmatpush.msra.mxu0 %v183
  %195 = vmatpush.msra.mxu0 %v182
  %196 = vmatpush.msra.mxu0 %v181
  %197 = vmatpush.msra.mxu0 %v180
  %198 = vmatpush.msra.mxu0 %v179
  %199 = vmatpush.msra.mxu0 %v178
  %200 = vmatpush.msra.mxu0 %v177
  %201 = vmatpush.msra.mxu0 %v176
  %202 = vmatpush.msra.mxu0 %v175
  %203 = vmatpush.msra.mxu0 %v174
  %204 = vmatpush.msra.mxu0 %v173
  %205 = vmatmul.f32.gmra.mxu0 %v170
  %v206 = vpop.f32.mrf.mxu0
  %v207 = vadd.f32 0.0, %v206
  %208 = vdwg.mxu0
  %209 = vmatpush.msra.mxu0 %v146
  %210 = vmatpush.msra.mxu0 %v145
  %211 = vmatpush.msra.mxu0 %v144
  %212 = vmatpush.msra.mxu0 %v143
  %213 = vmatpush.msra.mxu0 %v142
  %214 = vmatpush.msra.mxu0 %v141
  %215 = vmatpush.msra.mxu0 %v140
  %216 = vmatpush.msra.mxu0 %v139
  %217 = vmatpush.msra.mxu0 %v138
  %218 = vmatpush.msra.mxu0 %v137
  %219 = vmatpush.msra.mxu0 %v136
  %220 = vmatpush.msra.mxu0 %v135
  %221 = vmatpush.msra.mxu0 %v134
  %222 = vmatpush.msra.mxu0 %v133
  %223 = vmatpush.msra.mxu0 %v132
  %224 = vmatpush.msra.mxu0 %v131
  %225 = vmatmul.f32.gmra.mxu0 %v129
  %v226 = vpop.f32.mrf.mxu0
  %v227 = vadd.f32 %v207, %v226
  %228 = vdwg.mxu0
  %s229 = scalar_lea.vmem %s5, 16
  %v230 = vld [vmem:[%s229] sm:$0xff]
  %v232 = vsel %vm107, %v230, 0
  %234 = vmatpush.msra.mxu0 0.0
  %235 = vmatpush.msra.mxu0 0.0
  %236 = vmatpush.msra.mxu0 0.0
  %237 = vmatpush.msra.mxu0 0.0
  %238 = vmatpush.msra.mxu0 0.0
  %239 = vmatpush.msra.mxu0 0.0
  %240 = vmatpush.msra.mxu0 0.0
  %241 = vmatpush.msra.mxu0 0.0
  %242 = vmatpush.msra.mxu0 0.0
  %243 = vmatpush.msra.mxu0 0.0
  %244 = vmatpush.msra.mxu0 0.0
  %245 = vmatpush.msra.mxu0 0.0
  %246 = vmatpush.msra.mxu0 0.0
  %247 = vmatpush.msra.mxu0 0.0
  %248 = vmatpush.msra.mxu0 0.0
  %249 = vmatpush.msra.mxu0 %v105
  %250 = vmatmul.f32.gmra.mxu0 %v232
  %v251 = vpop.f32.mrf.mxu0
  %v252 = vadd.f32 0.0, %v251
  %253 = vdwg.mxu0
  %s254 = scalar_lea.vmem %s4, 256
  %v255 = vld [vmem:[%s254] sm:$0xff]
  %v256 = vld [vmem:[%s254 + $0x8] sm:$0xff]
  %v257 = vld [vmem:[%s254 + $0x10] sm:$0xff]
  %v258 = vld [vmem:[%s254 + $0x18] sm:$0xff]
  %v259 = vld [vmem:[%s254 + $0x20] sm:$0xff]
  %v260 = vld [vmem:[%s254 + $0x28] sm:$0xff]
  %v261 = vld [vmem:[%s254 + $0x30] sm:$0xff]
  %v262 = vld [vmem:[%s254 + $0x38] sm:$0xff]
  %v263 = vld [vmem:[%s254 + $0x40] sm:$0xff]
  %v264 = vld [vmem:[%s254 + $0x48] sm:$0xff]
  %v265 = vld [vmem:[%s254 + $0x50] sm:$0xff]
  %v266 = vld [vmem:[%s254 + $0x58] sm:$0xff]
  %v267 = vld [vmem:[%s254 + $0x60] sm:$0xff]
  %v268 = vld [vmem:[%s254 + $0x68] sm:$0xff]
  %v269 = vld [vmem:[%s254 + $0x70] sm:$0xff]
  %v270 = vld [vmem:[%s254 + $0x78] sm:$0xff]
  %271 = vmatpush.msra.mxu0 %v270
  %272 = vmatpush.msra.mxu0 %v269
  %273 = vmatpush.msra.mxu0 %v268
  %274 = vmatpush.msra.mxu0 %v267
  %275 = vmatpush.msra.mxu0 %v266
  %276 = vmatpush.msra.mxu0 %v265
  %277 = vmatpush.msra.mxu0 %v264
  %278 = vmatpush.msra.mxu0 %v263
  %279 = vmatpush.msra.mxu0 %v262
  %280 = vmatpush.msra.mxu0 %v261
  %281 = vmatpush.msra.mxu0 %v260
  %282 = vmatpush.msra.mxu0 %v259
  %283 = vmatpush.msra.mxu0 %v258
  %284 = vmatpush.msra.mxu0 %v257
  %285 = vmatpush.msra.mxu0 %v256
  %286 = vmatpush.msra.mxu0 %v255
  %287 = vmatmul.f32.gmra.mxu0 %v252
  %v288 = vpop.f32.mrf.mxu0
  %v289 = vadd.f32 0.0, %v288
  %290 = vdwg.mxu0
  %v291 = vadd.f32 %v227, %v289
  %s292 = scalar_lea.vmem %s5, 24
  %v293 = vld [vmem:[%s292] sm:$0xff]
  %v295 = vsel %vm107, %v293, 0
  %297 = vmatpush.msra.mxu0 0.0
  %298 = vmatpush.msra.mxu0 0.0
  %299 = vmatpush.msra.mxu0 0.0
  %300 = vmatpush.msra.mxu0 0.0
  %301 = vmatpush.msra.mxu0 0.0
  %302 = vmatpush.msra.mxu0 0.0
  %303 = vmatpush.msra.mxu0 0.0
  %304 = vmatpush.msra.mxu0 0.0
  %305 = vmatpush.msra.mxu0 0.0
  %306 = vmatpush.msra.mxu0 0.0
  %307 = vmatpush.msra.mxu0 0.0
  %308 = vmatpush.msra.mxu0 0.0
  %309 = vmatpush.msra.mxu0 0.0
  %310 = vmatpush.msra.mxu0 0.0
  %311 = vmatpush.msra.mxu0 0.0
  %312 = vmatpush.msra.mxu0 %v105
  %313 = vmatmul.f32.gmra.mxu0 %v295
  %v314 = vpop.f32.mrf.mxu0
  %v315 = vadd.f32 0.0, %v314
  %316 = vdwg.mxu0
  %s317 = scalar_lea.vmem %s4, 384
  %v318 = vld [vmem:[%s317] sm:$0xff]
  %v319 = vld [vmem:[%s317 + $0x8] sm:$0xff]
  %v320 = vld [vmem:[%s317 + $0x10] sm:$0xff]
  %v321 = vld [vmem:[%s317 + $0x18] sm:$0xff]
  %v322 = vld [vmem:[%s317 + $0x20] sm:$0xff]
  %v323 = vld [vmem:[%s317 + $0x28] sm:$0xff]
  %v324 = vld [vmem:[%s317 + $0x30] sm:$0xff]
  %v325 = vld [vmem:[%s317 + $0x38] sm:$0xff]
  %v326 = vld [vmem:[%s317 + $0x40] sm:$0xff]
  %v327 = vld [vmem:[%s317 + $0x48] sm:$0xff]
  %v328 = vld [vmem:[%s317 + $0x50] sm:$0xff]
  %v329 = vld [vmem:[%s317 + $0x58] sm:$0xff]
  %v330 = vld [vmem:[%s317 + $0x60] sm:$0xff]
  %v331 = vld [vmem:[%s317 + $0x68] sm:$0xff]
  %v332 = vld [vmem:[%s317 + $0x70] sm:$0xff]
  %v333 = vld [vmem:[%s317 + $0x78] sm:$0xff]
  %334 = vmatpush.msra.mxu0 %v333
  %335 = vmatpush.msra.mxu0 %v332
  %336 = vmatpush.msra.mxu0 %v331
  %337 = vmatpush.msra.mxu0 %v330
  %338 = vmatpush.msra.mxu0 %v329
  %339 = vmatpush.msra.mxu0 %v328
  %340 = vmatpush.msra.mxu0 %v327
  %341 = vmatpush.msra.mxu0 %v326
  %342 = vmatpush.msra.mxu0 %v325
  %343 = vmatpush.msra.mxu0 %v324
  %344 = vmatpush.msra.mxu0 %v323
  %345 = vmatpush.msra.mxu0 %v322
  %346 = vmatpush.msra.mxu0 %v321
  %347 = vmatpush.msra.mxu0 %v320
  %348 = vmatpush.msra.mxu0 %v319
  %349 = vmatpush.msra.mxu0 %v318
  %350 = vmatmul.f32.gmra.mxu0 %v315
  %v351 = vpop.f32.mrf.mxu0
  %v352 = vadd.f32 0.0, %v351
  %353 = vdwg.mxu0
  %v354 = vadd.f32 %v291, %v352
  %s355 = scalar_lea.vmem %s5, 32
  %v356 = vld [vmem:[%s355] sm:$0xff]
  %v358 = vsel %vm107, %v356, 0
  %360 = vmatpush.msra.mxu0 0.0
  %361 = vmatpush.msra.mxu0 0.0
  %362 = vmatpush.msra.mxu0 0.0
  %363 = vmatpush.msra.mxu0 0.0
  %364 = vmatpush.msra.mxu0 0.0
  %365 = vmatpush.msra.mxu0 0.0
  %366 = vmatpush.msra.mxu0 0.0
  %367 = vmatpush.msra.mxu0 0.0
  %368 = vmatpush.msra.mxu0 0.0
  %369 = vmatpush.msra.mxu0 0.0
  %370 = vmatpush.msra.mxu0 0.0
  %371 = vmatpush.msra.mxu0 0.0
  %372 = vmatpush.msra.mxu0 0.0
  %373 = vmatpush.msra.mxu0 0.0
  %374 = vmatpush.msra.mxu0 0.0
  %375 = vmatpush.msra.mxu0 %v105
  %376 = vmatmul.f32.gmra.mxu0 %v358
  %v377 = vpop.f32.mrf.mxu0
  %v378 = vadd.f32 0.0, %v377
  %379 = vdwg.mxu0
  %s380 = scalar_lea.vmem %s4, 512
  %v381 = vld [vmem:[%s380] sm:$0xff]
  %v382 = vld [vmem:[%s380 + $0x8] sm:$0xff]
  %v383 = vld [vmem:[%s380 + $0x10] sm:$0xff]
  %v384 = vld [vmem:[%s380 + $0x18] sm:$0xff]
  %v385 = vld [vmem:[%s380 + $0x20] sm:$0xff]
  %v386 = vld [vmem:[%s380 + $0x28] sm:$0xff]
  %v387 = vld [vmem:[%s380 + $0x30] sm:$0xff]
  %v388 = vld [vmem:[%s380 + $0x38] sm:$0xff]
  %v389 = vld [vmem:[%s380 + $0x40] sm:$0xff]
  %v390 = vld [vmem:[%s380 + $0x48] sm:$0xff]
  %v391 = vld [vmem:[%s380 + $0x50] sm:$0xff]
  %v392 = vld [vmem:[%s380 + $0x58] sm:$0xff]
  %v393 = vld [vmem:[%s380 + $0x60] sm:$0xff]
  %v394 = vld [vmem:[%s380 + $0x68] sm:$0xff]
  %v395 = vld [vmem:[%s380 + $0x70] sm:$0xff]
  %v396 = vld [vmem:[%s380 + $0x78] sm:$0xff]
  %397 = vmatpush.msra.mxu0 %v396
  %398 = vmatpush.msra.mxu0 %v395
  %399 = vmatpush.msra.mxu0 %v394
  %400 = vmatpush.msra.mxu0 %v393
  %401 = vmatpush.msra.mxu0 %v392
  %402 = vmatpush.msra.mxu0 %v391
  %403 = vmatpush.msra.mxu0 %v390
  %404 = vmatpush.msra.mxu0 %v389
  %405 = vmatpush.msra.mxu0 %v388
  %406 = vmatpush.msra.mxu0 %v387
  %407 = vmatpush.msra.mxu0 %v386
  %408 = vmatpush.msra.mxu0 %v385
  %409 = vmatpush.msra.mxu0 %v384
  %410 = vmatpush.msra.mxu0 %v383
  %411 = vmatpush.msra.mxu0 %v382
  %412 = vmatpush.msra.mxu0 %v381
  %413 = vmatmul.f32.gmra.mxu0 %v378
  %v414 = vpop.f32.mrf.mxu0
  %v415 = vadd.f32 0.0, %v414
  %416 = vdwg.mxu0
  %v417 = vadd.f32 %v354, %v415
  %s418 = scalar_lea.vmem %s5, 40
  %v419 = vld [vmem:[%s418] sm:$0xff]
  %v421 = vsel %vm107, %v419, 0
  %423 = vmatpush.msra.mxu0 0.0
  %424 = vmatpush.msra.mxu0 0.0
  %425 = vmatpush.msra.mxu0 0.0
  %426 = vmatpush.msra.mxu0 0.0
  %427 = vmatpush.msra.mxu0 0.0
  %428 = vmatpush.msra.mxu0 0.0
  %429 = vmatpush.msra.mxu0 0.0
  %430 = vmatpush.msra.mxu0 0.0
  %431 = vmatpush.msra.mxu0 0.0
  %432 = vmatpush.msra.mxu0 0.0
  %433 = vmatpush.msra.mxu0 0.0
  %434 = vmatpush.msra.mxu0 0.0
  %435 = vmatpush.msra.mxu0 0.0
  %436 = vmatpush.msra.mxu0 0.0
  %437 = vmatpush.msra.mxu0 0.0
  %438 = vmatpush.msra.mxu0 %v105
  %439 = vmatmul.f32.gmra.mxu0 %v421
  %v440 = vpop.f32.mrf.mxu0
  %v441 = vadd.f32 0.0, %v440
  %442 = vdwg.mxu0
  %s443 = scalar_lea.vmem %s4, 640
  %v444 = vld [vmem:[%s443] sm:$0xff]
  %v445 = vld [vmem:[%s443 + $0x8] sm:$0xff]
  %v446 = vld [vmem:[%s443 + $0x10] sm:$0xff]
  %v447 = vld [vmem:[%s443 + $0x18] sm:$0xff]
  %v448 = vld [vmem:[%s443 + $0x20] sm:$0xff]
  %v449 = vld [vmem:[%s443 + $0x28] sm:$0xff]
  %v450 = vld [vmem:[%s443 + $0x30] sm:$0xff]
  %v451 = vld [vmem:[%s443 + $0x38] sm:$0xff]
  %v452 = vld [vmem:[%s443 + $0x40] sm:$0xff]
  %v453 = vld [vmem:[%s443 + $0x48] sm:$0xff]
  %v454 = vld [vmem:[%s443 + $0x50] sm:$0xff]
  %v455 = vld [vmem:[%s443 + $0x58] sm:$0xff]
  %v456 = vld [vmem:[%s443 + $0x60] sm:$0xff]
  %v457 = vld [vmem:[%s443 + $0x68] sm:$0xff]
  %v458 = vld [vmem:[%s443 + $0x70] sm:$0xff]
  %v459 = vld [vmem:[%s443 + $0x78] sm:$0xff]
  %460 = vmatpush.msra.mxu0 %v459
  %461 = vmatpush.msra.mxu0 %v458
  %462 = vmatpush.msra.mxu0 %v457
  %463 = vmatpush.msra.mxu0 %v456
  %464 = vmatpush.msra.mxu0 %v455
  %465 = vmatpush.msra.mxu0 %v454
  %466 = vmatpush.msra.mxu0 %v453
  %467 = vmatpush.msra.mxu0 %v452
  %468 = vmatpush.msra.mxu0 %v451
  %469 = vmatpush.msra.mxu0 %v450
  %470 = vmatpush.msra.mxu0 %v449
  %471 = vmatpush.msra.mxu0 %v448
  %472 = vmatpush.msra.mxu0 %v447
  %473 = vmatpush.msra.mxu0 %v446
  %474 = vmatpush.msra.mxu0 %v445
  %475 = vmatpush.msra.mxu0 %v444
  %476 = vmatmul.f32.gmra.mxu0 %v441
  %v477 = vpop.f32.mrf.mxu0
  %v478 = vadd.f32 0.0, %v477
  %479 = vdwg.mxu0
  %v480 = vadd.f32 %v417, %v478
  %s481 = scalar_lea.vmem %s5, 48
  %v482 = vld [vmem:[%s481] sm:$0xff]
  %v484 = vsel %vm107, %v482, 0
  %486 = vmatpush.msra.mxu0 0.0
  %487 = vmatpush.msra.mxu0 0.0
  %488 = vmatpush.msra.mxu0 0.0
  %489 = vmatpush.msra.mxu0 0.0
  %490 = vmatpush.msra.mxu0 0.0
  %491 = vmatpush.msra.mxu0 0.0
  %492 = vmatpush.msra.mxu0 0.0
  %493 = vmatpush.msra.mxu0 0.0
  %494 = vmatpush.msra.mxu0 0.0
  %495 = vmatpush.msra.mxu0 0.0
  %496 = vmatpush.msra.mxu0 0.0
  %497 = vmatpush.msra.mxu0 0.0
  %498 = vmatpush.msra.mxu0 0.0
  %499 = vmatpush.msra.mxu0 0.0
  %500 = vmatpush.msra.mxu0 0.0
  %501 = vmatpush.msra.mxu0 %v105
  %502 = vmatmul.f32.gmra.mxu0 %v484
  %v503 = vpop.f32.mrf.mxu0
  %v504 = vadd.f32 0.0, %v503
  %505 = vdwg.mxu0
  %s506 = scalar_lea.vmem %s4, 768
  %v507 = vld [vmem:[%s506] sm:$0xff]
  %v508 = vld [vmem:[%s506 + $0x8] sm:$0xff]
  %v509 = vld [vmem:[%s506 + $0x10] sm:$0xff]
  %v510 = vld [vmem:[%s506 + $0x18] sm:$0xff]
  %v511 = vld [vmem:[%s506 + $0x20] sm:$0xff]
  %v512 = vld [vmem:[%s506 + $0x28] sm:$0xff]
  %v513 = vld [vmem:[%s506 + $0x30] sm:$0xff]
  %v514 = vld [vmem:[%s506 + $0x38] sm:$0xff]
  %v515 = vld [vmem:[%s506 + $0x40] sm:$0xff]
  %v516 = vld [vmem:[%s506 + $0x48] sm:$0xff]
  %v517 = vld [vmem:[%s506 + $0x50] sm:$0xff]
  %v518 = vld [vmem:[%s506 + $0x58] sm:$0xff]
  %v519 = vld [vmem:[%s506 + $0x60] sm:$0xff]
  %v520 = vld [vmem:[%s506 + $0x68] sm:$0xff]
  %v521 = vld [vmem:[%s506 + $0x70] sm:$0xff]
  %v522 = vld [vmem:[%s506 + $0x78] sm:$0xff]
  %523 = vmatpush.msra.mxu0 %v522
  %524 = vmatpush.msra.mxu0 %v521
  %525 = vmatpush.msra.mxu0 %v520
  %526 = vmatpush.msra.mxu0 %v519
  %527 = vmatpush.msra.mxu0 %v518
  %528 = vmatpush.msra.mxu0 %v517
  %529 = vmatpush.msra.mxu0 %v516
  %530 = vmatpush.msra.mxu0 %v515
  %531 = vmatpush.msra.mxu0 %v514
  %532 = vmatpush.msra.mxu0 %v513
  %533 = vmatpush.msra.mxu0 %v512
  %534 = vmatpush.msra.mxu0 %v511
  %535 = vmatpush.msra.mxu0 %v510
  %536 = vmatpush.msra.mxu0 %v509
  %537 = vmatpush.msra.mxu0 %v508
  %538 = vmatpush.msra.mxu0 %v507
  %539 = vmatmul.f32.gmra.mxu0 %v504
  %v540 = vpop.f32.mrf.mxu0
  %v541 = vadd.f32 0.0, %v540
  %542 = vdwg.mxu0
  %v543 = vadd.f32 %v480, %v541
  %s544 = scalar_lea.vmem %s5, 56
  %v545 = vld [vmem:[%s544] sm:$0xff]
  %v547 = vsel %vm107, %v545, 0
  %549 = vmatpush.msra.mxu0 0.0
  %550 = vmatpush.msra.mxu0 0.0
  %551 = vmatpush.msra.mxu0 0.0
  %552 = vmatpush.msra.mxu0 0.0
  %553 = vmatpush.msra.mxu0 0.0
  %554 = vmatpush.msra.mxu0 0.0
  %555 = vmatpush.msra.mxu0 0.0
  %556 = vmatpush.msra.mxu0 0.0
  %557 = vmatpush.msra.mxu0 0.0
  %558 = vmatpush.msra.mxu0 0.0
  %559 = vmatpush.msra.mxu0 0.0
  %560 = vmatpush.msra.mxu0 0.0
  %561 = vmatpush.msra.mxu0 0.0
  %562 = vmatpush.msra.mxu0 0.0
  %563 = vmatpush.msra.mxu0 0.0
  %564 = vmatpush.msra.mxu0 %v105
  %565 = vmatmul.f32.gmra.mxu0 %v547
  %v566 = vpop.f32.mrf.mxu0
  %v567 = vadd.f32 0.0, %v566
  %568 = vdwg.mxu0
  %s569 = scalar_lea.vmem %s4, 896
  %v570 = vld [vmem:[%s569] sm:$0xff]
  %v571 = vld [vmem:[%s569 + $0x8] sm:$0xff]
  %v572 = vld [vmem:[%s569 + $0x10] sm:$0xff]
  %v573 = vld [vmem:[%s569 + $0x18] sm:$0xff]
  %v574 = vld [vmem:[%s569 + $0x20] sm:$0xff]
  %v575 = vld [vmem:[%s569 + $0x28] sm:$0xff]
  %v576 = vld [vmem:[%s569 + $0x30] sm:$0xff]
  %v577 = vld [vmem:[%s569 + $0x38] sm:$0xff]
  %v578 = vld [vmem:[%s569 + $0x40] sm:$0xff]
  %v579 = vld [vmem:[%s569 + $0x48] sm:$0xff]
  %v580 = vld [vmem:[%s569 + $0x50] sm:$0xff]
  %v581 = vld [vmem:[%s569 + $0x58] sm:$0xff]
  %v582 = vld [vmem:[%s569 + $0x60] sm:$0xff]
  %v583 = vld [vmem:[%s569 + $0x68] sm:$0xff]
  %v584 = vld [vmem:[%s569 + $0x70] sm:$0xff]
  %v585 = vld [vmem:[%s569 + $0x78] sm:$0xff]
  %586 = vmatpush.msra.mxu0 %v585
  %587 = vmatpush.msra.mxu0 %v584
  %588 = vmatpush.msra.mxu0 %v583
  %589 = vmatpush.msra.mxu0 %v582
  %590 = vmatpush.msra.mxu0 %v581
  %591 = vmatpush.msra.mxu0 %v580
  %592 = vmatpush.msra.mxu0 %v579
  %593 = vmatpush.msra.mxu0 %v578
  %594 = vmatpush.msra.mxu0 %v577
  %595 = vmatpush.msra.mxu0 %v576
  %596 = vmatpush.msra.mxu0 %v575
  %597 = vmatpush.msra.mxu0 %v574
  %598 = vmatpush.msra.mxu0 %v573
  %599 = vmatpush.msra.mxu0 %v572
  %600 = vmatpush.msra.mxu0 %v571
  %601 = vmatpush.msra.mxu0 %v570
  %602 = vmatmul.f32.gmra.mxu0 %v567
  %v603 = vpop.f32.mrf.mxu0
  %v604 = vadd.f32 0.0, %v603
  %605 = vdwg.mxu0
  %v606 = vadd.f32 %v543, %v604
  %s607 = scalar_lea.vmem %s5, 64
  %v608 = vld [vmem:[%s607] sm:$0xff]
  %v610 = vsel %vm107, %v608, 0
  %612 = vmatpush.msra.mxu0 0.0
  %613 = vmatpush.msra.mxu0 0.0
  %614 = vmatpush.msra.mxu0 0.0
  %615 = vmatpush.msra.mxu0 0.0
  %616 = vmatpush.msra.mxu0 0.0
  %617 = vmatpush.msra.mxu0 0.0
  %618 = vmatpush.msra.mxu0 0.0
  %619 = vmatpush.msra.mxu0 0.0
  %620 = vmatpush.msra.mxu0 0.0
  %621 = vmatpush.msra.mxu0 0.0
  %622 = vmatpush.msra.mxu0 0.0
  %623 = vmatpush.msra.mxu0 0.0
  %624 = vmatpush.msra.mxu0 0.0
  %625 = vmatpush.msra.mxu0 0.0
  %626 = vmatpush.msra.mxu0 0.0
  %627 = vmatpush.msra.mxu0 %v105
  %628 = vmatmul.f32.gmra.mxu0 %v610
  %v629 = vpop.f32.mrf.mxu0
  %v630 = vadd.f32 0.0, %v629
  %631 = vdwg.mxu0
  %s632 = scalar_lea.vmem %s4, 1024
  %v633 = vld [vmem:[%s632] sm:$0xff]
  %v634 = vld [vmem:[%s632 + $0x8] sm:$0xff]
  %v635 = vld [vmem:[%s632 + $0x10] sm:$0xff]
  %v636 = vld [vmem:[%s632 + $0x18] sm:$0xff]
  %v637 = vld [vmem:[%s632 + $0x20] sm:$0xff]
  %v638 = vld [vmem:[%s632 + $0x28] sm:$0xff]
  %v639 = vld [vmem:[%s632 + $0x30] sm:$0xff]
  %v640 = vld [vmem:[%s632 + $0x38] sm:$0xff]
  %v641 = vld [vmem:[%s632 + $0x40] sm:$0xff]
  %v642 = vld [vmem:[%s632 + $0x48] sm:$0xff]
  %v643 = vld [vmem:[%s632 + $0x50] sm:$0xff]
  %v644 = vld [vmem:[%s632 + $0x58] sm:$0xff]
  %v645 = vld [vmem:[%s632 + $0x60] sm:$0xff]
  %v646 = vld [vmem:[%s632 + $0x68] sm:$0xff]
  %v647 = vld [vmem:[%s632 + $0x70] sm:$0xff]
  %v648 = vld [vmem:[%s632 + $0x78] sm:$0xff]
  %649 = vmatpush.msra.mxu0 %v648
  %650 = vmatpush.msra.mxu0 %v647
  %651 = vmatpush.msra.mxu0 %v646
  %652 = vmatpush.msra.mxu0 %v645
  %653 = vmatpush.msra.mxu0 %v644
  %654 = vmatpush.msra.mxu0 %v643
  %655 = vmatpush.msra.mxu0 %v642
  %656 = vmatpush.msra.mxu0 %v641
  %657 = vmatpush.msra.mxu0 %v640
  %658 = vmatpush.msra.mxu0 %v639
  %659 = vmatpush.msra.mxu0 %v638
  %660 = vmatpush.msra.mxu0 %v637
  %661 = vmatpush.msra.mxu0 %v636
  %662 = vmatpush.msra.mxu0 %v635
  %663 = vmatpush.msra.mxu0 %v634
  %664 = vmatpush.msra.mxu0 %v633
  %665 = vmatmul.f32.gmra.mxu0 %v630
  %v666 = vpop.f32.mrf.mxu0
  %v667 = vadd.f32 0.0, %v666
  %668 = vdwg.mxu0
  %v669 = vadd.f32 %v606, %v667
  %v670 = vld [vmem:[%s2] sm:$0xff]
  %v671 = vld [vmem:[%s2 + $0x8] sm:$0xff]
  %v672 = vld [vmem:[%s3] sm:$0xff]
  %v673 = vld [vmem:[%s3 + $0x8] sm:$0xff]
  %v674 = vld [vmem:[%s3 + $0x10] sm:$0xff]
  %v675 = vld [vmem:[%s3 + $0x18] sm:$0xff]
  %v676 = vld [vmem:[%s3 + $0x20] sm:$0xff]
  %v677 = vld [vmem:[%s3 + $0x28] sm:$0xff]
  %v678 = vld [vmem:[%s3 + $0x30] sm:$0xff]
  %v679 = vld [vmem:[%s3 + $0x38] sm:$0xff]
  %v680 = vld [vmem:[%s3 + $0x40] sm:$0xff]
  %v681 = vld [vmem:[%s3 + $0x48] sm:$0xff]
  %v682 = vld [vmem:[%s3 + $0x50] sm:$0xff]
  %v683 = vld [vmem:[%s3 + $0x58] sm:$0xff]
  %v684 = vld [vmem:[%s3 + $0x60] sm:$0xff]
  %v685 = vld [vmem:[%s3 + $0x68] sm:$0xff]
  %v686 = vld [vmem:[%s3 + $0x70] sm:$0xff]
  %v687 = vld [vmem:[%s3 + $0x78] sm:$0xff]
  %v688 = vld [vmem:[%s3 + $0x80] sm:$0xff]
  %v689 = vld [vmem:[%s3 + $0x88] sm:$0xff]
  %v690 = vld [vmem:[%s3 + $0x90] sm:$0xff]
  %v691 = vld [vmem:[%s3 + $0x98] sm:$0xff]
  %v692 = vld [vmem:[%s3 + $0xa0] sm:$0xff]
  %v693 = vld [vmem:[%s3 + $0xa8] sm:$0xff]
  %v694 = vld [vmem:[%s3 + $0xb0] sm:$0xff]
  %v695 = vld [vmem:[%s3 + $0xb8] sm:$0xff]
  %v696 = vld [vmem:[%s3 + $0xc0] sm:$0xff]
  %v697 = vld [vmem:[%s3 + $0xc8] sm:$0xff]
  %v698 = vld [vmem:[%s3 + $0xd0] sm:$0xff]
  %v699 = vld [vmem:[%s3 + $0xd8] sm:$0xff]
  %v700 = vld [vmem:[%s3 + $0xe0] sm:$0xff]
  %v701 = vld [vmem:[%s3 + $0xe8] sm:$0xff]
  %v702 = vld [vmem:[%s3 + $0xf0] sm:$0xff]
  %v703 = vld [vmem:[%s3 + $0xf8] sm:$0xff]
  %v704 = vld [vmem:[%s3 + $0x100] sm:$0xff]
  %v705 = vld [vmem:[%s3 + $0x108] sm:$0xff]
  %v706 = vld [vmem:[%s3 + $0x110] sm:$0xff]
  %v707 = vld [vmem:[%s3 + $0x118] sm:$0xff]
  %v708 = vld [vmem:[%s3 + $0x120] sm:$0xff]
  %v709 = vld [vmem:[%s3 + $0x128] sm:$0xff]
  %v710 = vld [vmem:[%s3 + $0x130] sm:$0xff]
  %v711 = vld [vmem:[%s3 + $0x138] sm:$0xff]
  %v712 = vld [vmem:[%s3 + $0x140] sm:$0xff]
  %v713 = vld [vmem:[%s3 + $0x148] sm:$0xff]
  %v714 = vld [vmem:[%s3 + $0x150] sm:$0xff]
  %v715 = vld [vmem:[%s3 + $0x158] sm:$0xff]
  %v716 = vld [vmem:[%s3 + $0x160] sm:$0xff]
  %v717 = vld [vmem:[%s3 + $0x168] sm:$0xff]
  %v718 = vld [vmem:[%s3 + $0x170] sm:$0xff]
  %v719 = vld [vmem:[%s3 + $0x178] sm:$0xff]
  %v720 = vld [vmem:[%s3 + $0x180] sm:$0xff]
  %v721 = vld [vmem:[%s3 + $0x188] sm:$0xff]
  %v722 = vld [vmem:[%s3 + $0x190] sm:$0xff]
  %v723 = vld [vmem:[%s3 + $0x198] sm:$0xff]
  %v724 = vld [vmem:[%s3 + $0x1a0] sm:$0xff]
  %v725 = vld [vmem:[%s3 + $0x1a8] sm:$0xff]
  %v726 = vld [vmem:[%s3 + $0x1b0] sm:$0xff]
  %v727 = vld [vmem:[%s3 + $0x1b8] sm:$0xff]
  %v728 = vld [vmem:[%s3 + $0x1c0] sm:$0xff]
  %v729 = vld [vmem:[%s3 + $0x1c8] sm:$0xff]
  %v730 = vld [vmem:[%s3 + $0x1d0] sm:$0xff]
  %v731 = vld [vmem:[%s3 + $0x1d8] sm:$0xff]
  %v732 = vld [vmem:[%s3 + $0x1e0] sm:$0xff]
  %v733 = vld [vmem:[%s3 + $0x1e8] sm:$0xff]
  %v734 = vld [vmem:[%s3 + $0x1f0] sm:$0xff]
  %v735 = vld [vmem:[%s3 + $0x1f8] sm:$0xff]
  %738 = vst [vmem:[#allocation1] ss:$2 sm:$0xff] %v670
  %s739 = scalar_lea.vmem [#allocation1], 16
  %740 = vst [vmem:[%s739] ss:$2 sm:$0xff] %v671
  %v741 = vld.sshfl [vmem:[#allocation1] sm:$0xff pattern:$0x75316420]
  %v742 = vld.sshfl [vmem:[#allocation1 + $0x8] sm:$0xff pattern:$0x75316420]
  %v743 = vld.sshfl [vmem:[#allocation1 + $0x10] sm:$0xff pattern:$0x75316420]
  %v744 = vld.sshfl [vmem:[#allocation1 + $0x18] sm:$0xff pattern:$0x75316420]
  %749 = vmatpush.msra.mxu0 %v687
  %750 = vmatpush.msra.mxu0 %v686
  %751 = vmatpush.msra.mxu0 %v685
  %752 = vmatpush.msra.mxu0 %v684
  %753 = vmatpush.msra.mxu0 %v683
  %754 = vmatpush.msra.mxu0 %v682
  %755 = vmatpush.msra.mxu0 %v681
  %756 = vmatpush.msra.mxu0 %v680
  %757 = vmatpush.msra.mxu0 %v679
  %758 = vmatpush.msra.mxu0 %v678
  %759 = vmatpush.msra.mxu0 %v677
  %760 = vmatpush.msra.mxu0 %v676
  %761 = vmatpush.msra.mxu0 %v675
  %762 = vmatpush.msra.mxu0 %v674
  %763 = vmatpush.msra.mxu0 %v673
  %764 = vmatpush.msra.mxu0 %v672
  %765 = vmatmul.f32.gmra.mxu0 %v741
  %v766 = vpop.f32.mrf.mxu0
  %v767 = vadd.f32 0.0, %v766
  %768 = vdwg.mxu0
  %769 = vmatpush.msra.mxu0 %v703
  %770 = vmatpush.msra.mxu0 %v702
  %771 = vmatpush.msra.mxu0 %v701
  %772 = vmatpush.msra.mxu0 %v700
  %773 = vmatpush.msra.mxu0 %v699
  %774 = vmatpush.msra.mxu0 %v698
  %775 = vmatpush.msra.mxu0 %v697
  %776 = vmatpush.msra.mxu0 %v696
  %777 = vmatpush.msra.mxu0 %v695
  %778 = vmatpush.msra.mxu0 %v694
  %779 = vmatpush.msra.mxu0 %v693
  %780 = vmatpush.msra.mxu0 %v692
  %781 = vmatpush.msra.mxu0 %v691
  %782 = vmatpush.msra.mxu0 %v690
  %783 = vmatpush.msra.mxu0 %v689
  %784 = vmatpush.msra.mxu0 %v688
  %785 = vmatmul.f32.gmra.mxu0 %v742
  %v786 = vpop.f32.mrf.mxu0
  %v787 = vadd.f32 %v767, %v786
  %788 = vdwg.mxu0
  %789 = vmatpush.msra.mxu0 %v719
  %790 = vmatpush.msra.mxu0 %v718
  %791 = vmatpush.msra.mxu0 %v717
  %792 = vmatpush.msra.mxu0 %v716
  %793 = vmatpush.msra.mxu0 %v715
  %794 = vmatpush.msra.mxu0 %v714
  %795 = vmatpush.msra.mxu0 %v713
  %796 = vmatpush.msra.mxu0 %v712
  %797 = vmatpush.msra.mxu0 %v711
  %798 = vmatpush.msra.mxu0 %v710
  %799 = vmatpush.msra.mxu0 %v709
  %800 = vmatpush.msra.mxu0 %v708
  %801 = vmatpush.msra.mxu0 %v707
  %802 = vmatpush.msra.mxu0 %v706
  %803 = vmatpush.msra.mxu0 %v705
  %804 = vmatpush.msra.mxu0 %v704
  %805 = vmatmul.f32.gmra.mxu0 %v743
  %v806 = vpop.f32.mrf.mxu0
  %v807 = vadd.f32 %v787, %v806
  %808 = vdwg.mxu0
  %809 = vmatpush.msra.mxu0 %v735
  %810 = vmatpush.msra.mxu0 %v734
  %811 = vmatpush.msra.mxu0 %v733
  %812 = vmatpush.msra.mxu0 %v732
  %813 = vmatpush.msra.mxu0 %v731
  %814 = vmatpush.msra.mxu0 %v730
  %815 = vmatpush.msra.mxu0 %v729
  %816 = vmatpush.msra.mxu0 %v728
  %817 = vmatpush.msra.mxu0 %v727
  %818 = vmatpush.msra.mxu0 %v726
  %819 = vmatpush.msra.mxu0 %v725
  %820 = vmatpush.msra.mxu0 %v724
  %821 = vmatpush.msra.mxu0 %v723
  %822 = vmatpush.msra.mxu0 %v722
  %823 = vmatpush.msra.mxu0 %v721
  %824 = vmatpush.msra.mxu0 %v720
  %825 = vmatmul.f32.gmra.mxu0 %v744
  %v826 = vpop.f32.mrf.mxu0
  %v827 = vadd.f32 %v807, %v826
  %828 = vdwg.mxu0
  %v829 = vld [vmem:[%s6] sm:$0xff]
  %vm830 = vcmask 31744
  %v832 = vsel %vm830, %v829, 0
  %vm834 = vcmask 1043456
  %v836 = vsel %vm834, %v827, 0
  %838 = vmatpush.msra.mxu0 0.0
  %839 = vmatpush.msra.mxu0 0.0
  %840 = vmatpush.msra.mxu0 0.0
  %841 = vmatpush.msra.mxu0 0.0
  %842 = vmatpush.msra.mxu0 0.0
  %843 = vmatpush.msra.mxu0 0.0
  %844 = vmatpush.msra.mxu0 0.0
  %845 = vmatpush.msra.mxu0 0.0
  %846 = vmatpush.msra.mxu0 0.0
  %847 = vmatpush.msra.mxu0 0.0
  %848 = vmatpush.msra.mxu0 0.0
  %849 = vmatpush.msra.mxu0 0.0
  %850 = vmatpush.msra.mxu0 0.0
  %851 = vmatpush.msra.mxu0 0.0
  %852 = vmatpush.msra.mxu0 0.0
  %853 = vmatpush.msra.mxu0 %v836
  %854 = vmatmul.f32.gmra.mxu0 %v832
  %v855 = vpop.f32.mrf.mxu0
  %v856 = vadd.f32 0.0, %v855
  %857 = vdwg.mxu0
  %s858 = scalar_lea.vmem %s6, 8
  %v859 = vld [vmem:[%s858] sm:$0xff]
  %v861 = vsel %vm830, %v859, 0
  %863 = vmatpush.msra.mxu0 0.0
  %864 = vmatpush.msra.mxu0 0.0
  %865 = vmatpush.msra.mxu0 0.0
  %866 = vmatpush.msra.mxu0 0.0
  %867 = vmatpush.msra.mxu0 0.0
  %868 = vmatpush.msra.mxu0 0.0
  %869 = vmatpush.msra.mxu0 0.0
  %870 = vmatpush.msra.mxu0 0.0
  %871 = vmatpush.msra.mxu0 0.0
  %872 = vmatpush.msra.mxu0 0.0
  %873 = vmatpush.msra.mxu0 0.0
  %874 = vmatpush.msra.mxu0 0.0
  %875 = vmatpush.msra.mxu0 0.0
  %876 = vmatpush.msra.mxu0 0.0
  %877 = vmatpush.msra.mxu0 0.0
  %878 = vmatpush.msra.mxu0 %v836
  %879 = vmatmul.f32.gmra.mxu0 %v861
  %v880 = vpop.f32.mrf.mxu0
  %v881 = vadd.f32 0.0, %v880
  %882 = vdwg.mxu0
  %883 = vmatpush.msra.mxu0 %v188
  %884 = vmatpush.msra.mxu0 %v187
  %885 = vmatpush.msra.mxu0 %v186
  %886 = vmatpush.msra.mxu0 %v185
  %887 = vmatpush.msra.mxu0 %v184
  %888 = vmatpush.msra.mxu0 %v183
  %889 = vmatpush.msra.mxu0 %v182
  %890 = vmatpush.msra.mxu0 %v181
  %891 = vmatpush.msra.mxu0 %v180
  %892 = vmatpush.msra.mxu0 %v179
  %893 = vmatpush.msra.mxu0 %v178
  %894 = vmatpush.msra.mxu0 %v177
  %895 = vmatpush.msra.mxu0 %v176
  %896 = vmatpush.msra.mxu0 %v175
  %897 = vmatpush.msra.mxu0 %v174
  %898 = vmatpush.msra.mxu0 %v173
  %899 = vmatmul.f32.gmra.mxu0 %v881
  %v900 = vpop.f32.mrf.mxu0
  %v901 = vadd.f32 0.0, %v900
  %902 = vdwg.mxu0
  %903 = vmatpush.msra.mxu0 %v146
  %904 = vmatpush.msra.mxu0 %v145
  %905 = vmatpush.msra.mxu0 %v144
  %906 = vmatpush.msra.mxu0 %v143
  %907 = vmatpush.msra.mxu0 %v142
  %908 = vmatpush.msra.mxu0 %v141
  %909 = vmatpush.msra.mxu0 %v140
  %910 = vmatpush.msra.mxu0 %v139
  %911 = vmatpush.msra.mxu0 %v138
  %912 = vmatpush.msra.mxu0 %v137
  %913 = vmatpush.msra.mxu0 %v136
  %914 = vmatpush.msra.mxu0 %v135
  %915 = vmatpush.msra.mxu0 %v134
  %916 = vmatpush.msra.mxu0 %v133
  %917 = vmatpush.msra.mxu0 %v132
  %918 = vmatpush.msra.mxu0 %v131
  %919 = vmatmul.f32.gmra.mxu0 %v856
  %v920 = vpop.f32.mrf.mxu0
  %v921 = vadd.f32 %v901, %v920
  %922 = vdwg.mxu0
  %s923 = scalar_lea.vmem %s6, 16
  %v924 = vld [vmem:[%s923] sm:$0xff]
  %v926 = vsel %vm830, %v924, 0
  %928 = vmatpush.msra.mxu0 0.0
  %929 = vmatpush.msra.mxu0 0.0
  %930 = vmatpush.msra.mxu0 0.0
  %931 = vmatpush.msra.mxu0 0.0
  %932 = vmatpush.msra.mxu0 0.0
  %933 = vmatpush.msra.mxu0 0.0
  %934 = vmatpush.msra.mxu0 0.0
  %935 = vmatpush.msra.mxu0 0.0
  %936 = vmatpush.msra.mxu0 0.0
  %937 = vmatpush.msra.mxu0 0.0
  %938 = vmatpush.msra.mxu0 0.0
  %939 = vmatpush.msra.mxu0 0.0
  %940 = vmatpush.msra.mxu0 0.0
  %941 = vmatpush.msra.mxu0 0.0
  %942 = vmatpush.msra.mxu0 0.0
  %943 = vmatpush.msra.mxu0 %v836
  %944 = vmatmul.f32.gmra.mxu0 %v926
  %v945 = vpop.f32.mrf.mxu0
  %v946 = vadd.f32 0.0, %v945
  %947 = vdwg.mxu0
  %948 = vmatpush.msra.mxu0 %v270
  %949 = vmatpush.msra.mxu0 %v269
  %950 = vmatpush.msra.mxu0 %v268
  %951 = vmatpush.msra.mxu0 %v267
  %952 = vmatpush.msra.mxu0 %v266
  %953 = vmatpush.msra.mxu0 %v265
  %954 = vmatpush.msra.mxu0 %v264
  %955 = vmatpush.msra.mxu0 %v263
  %956 = vmatpush.msra.mxu0 %v262
  %957 = vmatpush.msra.mxu0 %v261
  %958 = vmatpush.msra.mxu0 %v260
  %959 = vmatpush.msra.mxu0 %v259
  %960 = vmatpush.msra.mxu0 %v258
  %961 = vmatpush.msra.mxu0 %v257
  %962 = vmatpush.msra.mxu0 %v256
  %963 = vmatpush.msra.mxu0 %v255
  %964 = vmatmul.f32.gmra.mxu0 %v946
  %v965 = vpop.f32.mrf.mxu0
  %v966 = vadd.f32 0.0, %v965
  %967 = vdwg.mxu0
  %v968 = vadd.f32 %v921, %v966
  %s969 = scalar_lea.vmem %s6, 24
  %v970 = vld [vmem:[%s969] sm:$0xff]
  %v972 = vsel %vm830, %v970, 0
  %974 = vmatpush.msra.mxu0 0.0
  %975 = vmatpush.msra.mxu0 0.0
  %976 = vmatpush.msra.mxu0 0.0
  %977 = vmatpush.msra.mxu0 0.0
  %978 = vmatpush.msra.mxu0 0.0
  %979 = vmatpush.msra.mxu0 0.0
  %980 = vmatpush.msra.mxu0 0.0
  %981 = vmatpush.msra.mxu0 0.0
  %982 = vmatpush.msra.mxu0 0.0
  %983 = vmatpush.msra.mxu0 0.0
  %984 = vmatpush.msra.mxu0 0.0
  %985 = vmatpush.msra.mxu0 0.0
  %986 = vmatpush.msra.mxu0 0.0
  %987 = vmatpush.msra.mxu0 0.0
  %988 = vmatpush.msra.mxu0 0.0
  %989 = vmatpush.msra.mxu0 %v836
  %990 = vmatmul.f32.gmra.mxu0 %v972
  %v991 = vpop.f32.mrf.mxu0
  %v992 = vadd.f32 0.0, %v991
  %993 = vdwg.mxu0
  %994 = vmatpush.msra.mxu0 %v333
  %995 = vmatpush.msra.mxu0 %v332
  %996 = vmatpush.msra.mxu0 %v331
  %997 = vmatpush.msra.mxu0 %v330
  %998 = vmatpush.msra.mxu0 %v329
  %999 = vmatpush.msra.mxu0 %v328
  %1000 = vmatpush.msra.mxu0 %v327
  %1001 = vmatpush.msra.mxu0 %v326
  %1002 = vmatpush.msra.mxu0 %v325
  %1003 = vmatpush.msra.mxu0 %v324
  %1004 = vmatpush.msra.mxu0 %v323
  %1005 = vmatpush.msra.mxu0 %v322
  %1006 = vmatpush.msra.mxu0 %v321
  %1007 = vmatpush.msra.mxu0 %v320
  %1008 = vmatpush.msra.mxu0 %v319
  %1009 = vmatpush.msra.mxu0 %v318
  %1010 = vmatmul.f32.gmra.mxu0 %v992
  %v1011 = vpop.f32.mrf.mxu0
  %v1012 = vadd.f32 0.0, %v1011
  %1013 = vdwg.mxu0
  %v1014 = vadd.f32 %v968, %v1012
  %s1015 = scalar_lea.vmem %s6, 32
  %v1016 = vld [vmem:[%s1015] sm:$0xff]
  %v1018 = vsel %vm830, %v1016, 0
  %1020 = vmatpush.msra.mxu0 0.0
  %1021 = vmatpush.msra.mxu0 0.0
  %1022 = vmatpush.msra.mxu0 0.0
  %1023 = vmatpush.msra.mxu0 0.0
  %1024 = vmatpush.msra.mxu0 0.0
  %1025 = vmatpush.msra.mxu0 0.0
  %1026 = vmatpush.msra.mxu0 0.0
  %1027 = vmatpush.msra.mxu0 0.0
  %1028 = vmatpush.msra.mxu0 0.0
  %1029 = vmatpush.msra.mxu0 0.0
  %1030 = vmatpush.msra.mxu0 0.0
  %1031 = vmatpush.msra.mxu0 0.0
  %1032 = vmatpush.msra.mxu0 0.0
  %1033 = vmatpush.msra.mxu0 0.0
  %1034 = vmatpush.msra.mxu0 0.0
  %1035 = vmatpush.msra.mxu0 %v836
  %1036 = vmatmul.f32.gmra.mxu0 %v1018
  %v1037 = vpop.f32.mrf.mxu0
  %v1038 = vadd.f32 0.0, %v1037
  %1039 = vdwg.mxu0
  %1040 = vmatpush.msra.mxu0 %v396
  %1041 = vmatpush.msra.mxu0 %v395
  %1042 = vmatpush.msra.mxu0 %v394
  %1043 = vmatpush.msra.mxu0 %v393
  %1044 = vmatpush.msra.mxu0 %v392
  %1045 = vmatpush.msra.mxu0 %v391
  %1046 = vmatpush.msra.mxu0 %v390
  %1047 = vmatpush.msra.mxu0 %v389
  %1048 = vmatpush.msra.mxu0 %v388
  %1049 = vmatpush.msra.mxu0 %v387
  %1050 = vmatpush.msra.mxu0 %v386
  %1051 = vmatpush.msra.mxu0 %v385
  %1052 = vmatpush.msra.mxu0 %v384
  %1053 = vmatpush.msra.mxu0 %v383
  %1054 = vmatpush.msra.mxu0 %v382
  %1055 = vmatpush.msra.mxu0 %v381
  %1056 = vmatmul.f32.gmra.mxu0 %v1038
  %v1057 = vpop.f32.mrf.mxu0
  %v1058 = vadd.f32 0.0, %v1057
  %1059 = vdwg.mxu0
  %v1060 = vadd.f32 %v1014, %v1058
  %s1061 = scalar_lea.vmem %s6, 40
  %v1062 = vld [vmem:[%s1061] sm:$0xff]
  %v1064 = vsel %vm830, %v1062, 0
  %1066 = vmatpush.msra.mxu0 0.0
  %1067 = vmatpush.msra.mxu0 0.0
  %1068 = vmatpush.msra.mxu0 0.0
  %1069 = vmatpush.msra.mxu0 0.0
  %1070 = vmatpush.msra.mxu0 0.0
  %1071 = vmatpush.msra.mxu0 0.0
  %1072 = vmatpush.msra.mxu0 0.0
  %1073 = vmatpush.msra.mxu0 0.0
  %1074 = vmatpush.msra.mxu0 0.0
  %1075 = vmatpush.msra.mxu0 0.0
  %1076 = vmatpush.msra.mxu0 0.0
  %1077 = vmatpush.msra.mxu0 0.0
  %1078 = vmatpush.msra.mxu0 0.0
  %1079 = vmatpush.msra.mxu0 0.0
  %1080 = vmatpush.msra.mxu0 0.0
  %1081 = vmatpush.msra.mxu0 %v836
  %1082 = vmatmul.f32.gmra.mxu0 %v1064
  %v1083 = vpop.f32.mrf.mxu0
  %v1084 = vadd.f32 0.0, %v1083
  %1085 = vdwg.mxu0
  %1086 = vmatpush.msra.mxu0 %v459
  %1087 = vmatpush.msra.mxu0 %v458
  %1088 = vmatpush.msra.mxu0 %v457
  %1089 = vmatpush.msra.mxu0 %v456
  %1090 = vmatpush.msra.mxu0 %v455
  %1091 = vmatpush.msra.mxu0 %v454
  %1092 = vmatpush.msra.mxu0 %v453
  %1093 = vmatpush.msra.mxu0 %v452
  %1094 = vmatpush.msra.mxu0 %v451
  %1095 = vmatpush.msra.mxu0 %v450
  %1096 = vmatpush.msra.mxu0 %v449
  %1097 = vmatpush.msra.mxu0 %v448
  %1098 = vmatpush.msra.mxu0 %v447
  %1099 = vmatpush.msra.mxu0 %v446
  %1100 = vmatpush.msra.mxu0 %v445
  %1101 = vmatpush.msra.mxu0 %v444
  %1102 = vmatmul.f32.gmra.mxu0 %v1084
  %v1103 = vpop.f32.mrf.mxu0
  %v1104 = vadd.f32 0.0, %v1103
  %1105 = vdwg.mxu0
  %v1106 = vadd.f32 %v1060, %v1104
  %s1107 = scalar_lea.vmem %s6, 48
  %v1108 = vld [vmem:[%s1107] sm:$0xff]
  %v1110 = vsel %vm830, %v1108, 0
  %1112 = vmatpush.msra.mxu0 0.0
  %1113 = vmatpush.msra.mxu0 0.0
  %1114 = vmatpush.msra.mxu0 0.0
  %1115 = vmatpush.msra.mxu0 0.0
  %1116 = vmatpush.msra.mxu0 0.0
  %1117 = vmatpush.msra.mxu0 0.0
  %1118 = vmatpush.msra.mxu0 0.0
  %1119 = vmatpush.msra.mxu0 0.0
  %1120 = vmatpush.msra.mxu0 0.0
  %1121 = vmatpush.msra.mxu0 0.0
  %1122 = vmatpush.msra.mxu0 0.0
  %1123 = vmatpush.msra.mxu0 0.0
  %1124 = vmatpush.msra.mxu0 0.0
  %1125 = vmatpush.msra.mxu0 0.0
  %1126 = vmatpush.msra.mxu0 0.0
  %1127 = vmatpush.msra.mxu0 %v836
  %1128 = vmatmul.f32.gmra.mxu0 %v1110
  %v1129 = vpop.f32.mrf.mxu0
  %v1130 = vadd.f32 0.0, %v1129
  %1131 = vdwg.mxu0
  %1132 = vmatpush.msra.mxu0 %v522
  %1133 = vmatpush.msra.mxu0 %v521
  %1134 = vmatpush.msra.mxu0 %v520
  %1135 = vmatpush.msra.mxu0 %v519
  %1136 = vmatpush.msra.mxu0 %v518
  %1137 = vmatpush.msra.mxu0 %v517
  %1138 = vmatpush.msra.mxu0 %v516
  %1139 = vmatpush.msra.mxu0 %v515
  %1140 = vmatpush.msra.mxu0 %v514
  %1141 = vmatpush.msra.mxu0 %v513
  %1142 = vmatpush.msra.mxu0 %v512
  %1143 = vmatpush.msra.mxu0 %v511
  %1144 = vmatpush.msra.mxu0 %v510
  %1145 = vmatpush.msra.mxu0 %v509
  %1146 = vmatpush.msra.mxu0 %v508
  %1147 = vmatpush.msra.mxu0 %v507
  %1148 = vmatmul.f32.gmra.mxu0 %v1130
  %v1149 = vpop.f32.mrf.mxu0
  %v1150 = vadd.f32 0.0, %v1149
  %1151 = vdwg.mxu0
  %v1152 = vadd.f32 %v1106, %v1150
  %s1153 = scalar_lea.vmem %s6, 56
  %v1154 = vld [vmem:[%s1153] sm:$0xff]
  %v1156 = vsel %vm830, %v1154, 0
  %1158 = vmatpush.msra.mxu0 0.0
  %1159 = vmatpush.msra.mxu0 0.0
  %1160 = vmatpush.msra.mxu0 0.0
  %1161 = vmatpush.msra.mxu0 0.0
  %1162 = vmatpush.msra.mxu0 0.0
  %1163 = vmatpush.msra.mxu0 0.0
  %1164 = vmatpush.msra.mxu0 0.0
  %1165 = vmatpush.msra.mxu0 0.0
  %1166 = vmatpush.msra.mxu0 0.0
  %1167 = vmatpush.msra.mxu0 0.0
  %1168 = vmatpush.msra.mxu0 0.0
  %1169 = vmatpush.msra.mxu0 0.0
  %1170 = vmatpush.msra.mxu0 0.0
  %1171 = vmatpush.msra.mxu0 0.0
  %1172 = vmatpush.msra.mxu0 0.0
  %1173 = vmatpush.msra.mxu0 %v836
  %1174 = vmatmul.f32.gmra.mxu0 %v1156
  %v1175 = vpop.f32.mrf.mxu0
  %v1176 = vadd.f32 0.0, %v1175
  %1177 = vdwg.mxu0
  %1178 = vmatpush.msra.mxu0 %v585
  %1179 = vmatpush.msra.mxu0 %v584
  %1180 = vmatpush.msra.mxu0 %v583
  %1181 = vmatpush.msra.mxu0 %v582
  %1182 = vmatpush.msra.mxu0 %v581
  %1183 = vmatpush.msra.mxu0 %v580
  %1184 = vmatpush.msra.mxu0 %v579
  %1185 = vmatpush.msra.mxu0 %v578
  %1186 = vmatpush.msra.mxu0 %v577
  %1187 = vmatpush.msra.mxu0 %v576
  %1188 = vmatpush.msra.mxu0 %v575
  %1189 = vmatpush.msra.mxu0 %v574
  %1190 = vmatpush.msra.mxu0 %v573
  %1191 = vmatpush.msra.mxu0 %v572
  %1192 = vmatpush.msra.mxu0 %v571
  %1193 = vmatpush.msra.mxu0 %v570
  %1194 = vmatmul.f32.gmra.mxu0 %v1176
  %v1195 = vpop.f32.mrf.mxu0
  %v1196 = vadd.f32 0.0, %v1195
  %1197 = vdwg.mxu0
  %v1198 = vadd.f32 %v1152, %v1196
  %s1199 = scalar_lea.vmem %s6, 64
  %v1200 = vld [vmem:[%s1199] sm:$0xff]
  %v1202 = vsel %vm830, %v1200, 0
  %1204 = vmatpush.msra.mxu0 0.0
  %1205 = vmatpush.msra.mxu0 0.0
  %1206 = vmatpush.msra.mxu0 0.0
  %1207 = vmatpush.msra.mxu0 0.0
  %1208 = vmatpush.msra.mxu0 0.0
  %1209 = vmatpush.msra.mxu0 0.0
  %1210 = vmatpush.msra.mxu0 0.0
  %1211 = vmatpush.msra.mxu0 0.0
  %1212 = vmatpush.msra.mxu0 0.0
  %1213 = vmatpush.msra.mxu0 0.0
  %1214 = vmatpush.msra.mxu0 0.0
  %1215 = vmatpush.msra.mxu0 0.0
  %1216 = vmatpush.msra.mxu0 0.0
  %1217 = vmatpush.msra.mxu0 0.0
  %1218 = vmatpush.msra.mxu0 0.0
  %1219 = vmatpush.msra.mxu0 %v836
  %1220 = vmatmul.f32.gmra.mxu0 %v1202
  %v1221 = vpop.f32.mrf.mxu0
  %v1222 = vadd.f32 0.0, %v1221
  %1223 = vdwg.mxu0
  %1224 = vmatpush.msra.mxu0 %v648
  %1225 = vmatpush.msra.mxu0 %v647
  %1226 = vmatpush.msra.mxu0 %v646
  %1227 = vmatpush.msra.mxu0 %v645
  %1228 = vmatpush.msra.mxu0 %v644
  %1229 = vmatpush.msra.mxu0 %v643
  %1230 = vmatpush.msra.mxu0 %v642
  %1231 = vmatpush.msra.mxu0 %v641
  %1232 = vmatpush.msra.mxu0 %v640
  %1233 = vmatpush.msra.mxu0 %v639
  %1234 = vmatpush.msra.mxu0 %v638
  %1235 = vmatpush.msra.mxu0 %v637
  %1236 = vmatpush.msra.mxu0 %v636
  %1237 = vmatpush.msra.mxu0 %v635
  %1238 = vmatpush.msra.mxu0 %v634
  %1239 = vmatpush.msra.mxu0 %v633
  %1240 = vmatmul.f32.gmra.mxu0 %v1222
  %v1241 = vpop.f32.mrf.mxu0
  %v1242 = vadd.f32 0.0, %v1241
  %1243 = vdwg.mxu0
  %v1244 = vadd.f32 %v1198, %v1242
  %v1245 = vadd.f32 %v669, %v1244
  %v1246 = vmul.f32 %v1245, %v1245
  %v1247 = vrot.slane %v1246, 4
  %v1248 = vadd.f32 %v1246, %v1247
  %v1249 = vrot.slane %v1248, 2
  %v1250 = vadd.f32 %v1248, %v1249
  %v1251 = vrot.slane %v1250, 1
  %v1252 = vadd.f32 %v1250, %v1251
  %v1253 = vmul.f32 %v1252, %v72
  %v1254 = vadd.f32 %v1253, 1e-08
  %v1255 = vrsqrt.pop %v1254
  %v1256 = vmul.f32 %v1255, %v1254
  %v1257 = vmul.f32 %v1256, %v1255
  %v1258 = vmul.f32 0.5, %v1257
  %v1259 = vsub.f32 1.5, %v1258
  %v1260 = vmul.f32 %v1255, %v1259
  %vm1261 = vweird.f32 %v1254
  %vm1262 = vweird.f32 %v1255
  %vm1263 = vmor %vm1261, %vm1262
  %v1264 = vsel %vm1263, %v1255, %v1260
  %v1265 = vmul.f32 %v1245, %v1264
  %v1266 = vmax.f32 %v1265, 0.0
  %vm1267 = vcmp.ne.f32.partialorder %v1265, %v1265
  %v1268 = vadd.f32 %v1265, 0.0
  %v1269 = vand.u32 2147483647, %v1265
  %v1270 = vsub.f32 0.0, %v1269
  %v1271 = vmul.f32 %v1270, 1.442695
  %v1272 = vpow.pop %v1271
  %v1273 = vadd.f32 %v1272, 1.0
  %v1274 = vlog2.pop %v1273
  %v1275 = vmul.f32 %v1274, 0.6931472
  %v1276 = vmul.f32 -0.5, %v1272
  %v1277 = vadd.f32 %v1276, 1.0
  %v1278 = vmul.f32 %v1277, %v1272
  %v1279 = vand.u32 2147483647, %v1272
  %vm1280 = vcmp.lt.f32.partialorder %v1279, 0.0004427343
  %v1281 = vsel %vm1280, %v1278, %v1275
  %v1282 = vadd.f32 %v1266, %v1281
  %v1283 = vsel %vm1267, %v1268, %v1282
  %v1284 = vtanh.pop %v1283
  %v1285 = vmul.f32 %v1265, %v1284
  %1286 = vst [vmem:[%s7] sm:$0xff] %v1285
  // Predicated region
  $region30: #{discriminator_block.1} parent=0 // pred_check
    _
  $region31: #{discriminator_block.1} parent=0 // pred_check_branch
    %1288 = sbr.rel (0) target = $region33
  $region32: #{discriminator_block.1} parent=0 // pred_region
    _
  $region33: #{discriminator_block.1} parent=0 // pred_fallthru
    _
  // Predicated region
  $region34: #{discriminator_block.1} parent=0 // pred_check
    _
  $region35: #{discriminator_block.1} parent=0 // pred_check_branch
    %1290 = sbr.rel (0) target = $region37
  $region36: #{discriminator_block.1} parent=0 // pred_region
    _
  $region37: #{discriminator_block.1} parent=0 // pred_fallthru
    _

</llo_original>
